<compile_context>
chip_gen: v5e
topology: v5e:2x2
jax: 0.10.0
libtpu: 0.0.40
codegen_flags: <defaults>
</compile_context>

<pallas_src>
import functools

import jax
import jax.numpy as jnp
from jax import lax
from jax.experimental import pallas as pl
from jax.experimental.pallas import tpu as pltpu


def _round_up(x, m):
    return (x + m - 1) // m * m


def gru_seq_kernel(tok_ref,    # VMEM (T_pad, 1) int32 token ids (clamped, 0-padded)
                   emb_ref,    # VMEM (Vp, Hp)   bf16 embedding table (resident)
                   h0_ref,     # VMEM (1, Hp)    f32 initial hidden (lane-padded 0)
                   wih_ref,    # VMEM (Hp, 3Hp)  bf16 packed W_ih.T, gates 128-aligned
                   whh_ref,    # VMEM (Hp, 3Hp)  f32  packed W_hh.T, gates 128-aligned
                   ball_ref,   # VMEM (1, 3Hp)   f32 [b_ir+b_hr | b_iz+b_hz | b_in]
                   bhn_ref,    # VMEM (1, Hp)    f32 b_hn (stays inside r*(...))
                   out_ref,    # VMEM (T_pad, Hp) f32 all hidden states (lane-dense)
                   gi_ref,     # VMEM scratch (T_pad, 3Hp) f32 input-side gates
                   *, T, Hp):
    Vp = emb_ref.shape[0]
    T_pad = out_ref.shape[0]

    # ---- 1) Embedding lookup for ALL timesteps: one-hot gather as one MXU matmul.
    tok = tok_ref[...]                                           # (T_pad, 1) int32
    vocab_ids = lax.broadcasted_iota(jnp.int32, (T_pad, Vp), 1)
    onehot = (vocab_ids == tok).astype(jnp.bfloat16)             # (T_pad, Vp)
    x_all = jnp.dot(onehot, emb_ref[...],
                    preferred_element_type=jnp.float32).astype(jnp.bfloat16)

    # ---- 2) Input-side gate pre-activations for ALL timesteps in one matmul.
    gi_ref[...] = jnp.dot(x_all, wih_ref[...],
                          preferred_element_type=jnp.float32) + ball_ref[...]

    # ---- 3) Sequential recurrence; h carried as a loop value (no grid overhead).
    whh = whh_ref[...]
    b_hn = bhn_ref[...]
    out_ref[...] = jnp.zeros_like(out_ref)            # padded rows (t >= T) stay 0

    def step(t, h):
        gi = gi_ref[pl.ds(t, 1), :]                              # (1, 3Hp)
        gh = jnp.dot(h, whh, preferred_element_type=jnp.float32)
        r = jax.nn.sigmoid(gi[:, :Hp] + gh[:, :Hp])              # 128-aligned slices
        z = jax.nn.sigmoid(gi[:, Hp:2 * Hp] + gh[:, Hp:2 * Hp])
        n = jnp.tanh(gi[:, 2 * Hp:] + r * (gh[:, 2 * Hp:] + b_hn))
        h_new = (1.0 - z) * n + z * h
        out_ref[pl.ds(t, 1), :] = h_new
        return h_new

    # Fully unroll short sequences so slice/store offsets become static.
    lax.fori_loop(0, T, step, h0_ref[...], unroll=True if T <= 32 else 8)


def encoder_rnn_sequence(tokens, hidden, params):
    """Run T GRU steps (batch=1) in ONE pallas_call.

    tokens: int array (T,), hidden: (1, 1, H).
    Returns (outputs (T, 1, H), final hidden (1, 1, H)) -- nn.GRU(seq, batch=1).
    """
    H = params["hidden_size"]
    Hp = params["padded_hidden"]
    V = params["vocab_size"]
    emb = params["emb_bf16"]                 # (Vp, Hp) bf16
    wih = params["wih_packed"]               # (Hp, 3Hp) bf16
    whh = params["whh_packed"]               # (Hp, 3Hp) f32
    b_all, b_hn = params["b_all"], params["b_hn"]
    Vp = emb.shape[0]

    tokens = jnp.asarray(tokens, jnp.int32).reshape(-1)
    T = int(tokens.shape[0])
    T_pad = _round_up(max(T, 1), 8)
    tok_col = jnp.zeros((T_pad, 1), jnp.int32).at[:T, 0].set(
        jnp.clip(tokens, 0, V - 1))
    h0 = jnp.zeros((1, Hp), jnp.float32).at[:, :H].set(
        hidden.reshape(1, H).astype(jnp.float32))

    kernel = functools.partial(gru_seq_kernel, T=T, Hp=Hp)

    flops = (2 * T_pad * Vp * Hp             # one-hot embedding gather matmul
             + 2 * T_pad * Hp * 3 * Hp       # batched input-side gate matmul
             + 2 * T * Hp * 3 * Hp           # per-step hidden matmul
             + 12 * T * Hp)                  # gate elementwise
    transcendentals = 3 * Hp * T
    bytes_accessed = (4 * T_pad              # tokens
                      + 2 * Vp * Hp          # bf16 embedding table
                      + 2 * Hp * 3 * Hp      # bf16 W_ih
                      + 4 * Hp * 3 * Hp      # f32 W_hh
                      + 4 * (3 * Hp + 2 * Hp)   # biases + h0
                      + 4 * T_pad * Hp)      # output slab

    vmem = pltpu.MemorySpace.VMEM
    outs = pl.pallas_call(
        kernel,
        out_shape=jax.ShapeDtypeStruct((T_pad, Hp), jnp.float32),
        in_specs=[pl.BlockSpec(memory_space=vmem)] * 7,
        out_specs=pl.BlockSpec(memory_space=vmem),
        scratch_shapes=[pltpu.VMEM((T_pad, 3 * Hp), jnp.float32)],
        cost_estimate=pl.CostEstimate(flops=flops,
                                      transcendentals=transcendentals,
                                      bytes_accessed=bytes_accessed),
    )(tok_col, emb, h0, wih, whh, b_all, b_hn)

    outputs = outs[:T, :H].reshape(T, 1, H)
    h_T = outputs[T - 1].reshape(1, 1, H)
    return outputs, h_T


def encoder_rnn_forward(token, hidden, params):
    """Single-token forward matching EncoderRNN.forward: returns (output, hidden),
    both (1, 1, H)."""
    outputs, h_T = encoder_rnn_sequence(jnp.asarray(token, jnp.int32).reshape(1),
                                        hidden, params)
    return outputs, h_T


def init_params(key, input_size, hidden_size):
    """PyTorch-layout GRU/embedding parameters plus the padded, lane-aligned kernel
    layout. The embedding table and W_ih are rounded to bf16 (their f32 copies keep
    the rounded values) so the bf16 kernel and f32 reference use identical numbers."""
    H = hidden_size
    Hp = _round_up(H, 128)
    Vp = _round_up(input_size, 8)
    k_emb, k_wih, k_whh, k_bih, k_bhh = jax.random.split(key, 5)
    stdv = float(H) ** -0.5

    emb = jax.random.normal(k_emb, (input_size, H), jnp.float32)
    emb = emb.astype(jnp.bfloat16).astype(jnp.float32)           # bf16-exact values
    weight_ih = jax.random.uniform(k_wih, (3 * H, H), jnp.float32, -stdv, stdv)
    weight_ih = weight_ih.astype(jnp.bfloat16).astype(jnp.float32)
    weight_hh = jax.random.uniform(k_whh, (3 * H, H), jnp.float32, -stdv, stdv)
    bias_ih = jax.random.uniform(k_bih, (3 * H,), jnp.float32, -stdv, stdv)
    bias_hh = jax.random.uniform(k_bhh, (3 * H,), jnp.float32, -stdv, stdv)

    # Packed, lane-padded layout: x @ wih_packed -> (1, 3Hp) with the r/z/n column
    # groups each starting at a 128-aligned offset g*Hp.
    def pack(w, dtype):
        out = jnp.zeros((Hp, 3 * Hp), dtype)
        for g in range(3):
            out = out.at[:H, g * Hp:g * Hp + H].set(
                w[g * H:(g + 1) * H, :].T.astype(dtype))
        return out

    wih_packed = pack(weight_ih, jnp.bfloat16)   # bf16 input-side weights (exact)
    whh_packed = pack(weight_hh, jnp.float32)    # f32 keeps the recurrence accurate

    b_all = jnp.zeros((1, 3 * Hp), jnp.float32)
    for g in range(3):
        b = bias_ih[g * H:(g + 1) * H]
        if g < 2:                                # r, z: fold b_ih + b_hh
            b = b + bias_hh[g * H:(g + 1) * H]
        b_all = b_all.at[0, g * Hp:g * Hp + H].set(b)
    b_hn = jnp.zeros((1, Hp), jnp.float32).at[0, :H].set(bias_hh[2 * H:])

    emb_bf16 = jnp.zeros((Vp, Hp), jnp.bfloat16).at[:input_size, :H].set(
        emb.astype(jnp.bfloat16))

    return {"emb": emb, "weight_ih": weight_ih, "weight_hh": weight_hh,
            "bias_ih": bias_ih, "bias_hh": bias_hh,
            "emb_bf16": emb_bf16, "wih_packed": wih_packed, "whh_packed": whh_packed,
            "b_all": b_all, "b_hn": b_hn,
            "hidden_size": H, "padded_hidden": Hp, "vocab_size": input_size}


def reference_sequence(tokens, hidden, params):
    """Plain-JAX reference implementing torch.nn.GRU step semantics from the raw
    PyTorch-layout parameters (full f32)."""
    emb = params["emb"]
    W_ih, W_hh = params["weight_ih"], params["weight_hh"]
    b_ih, b_hh = params["bias_ih"], params["bias_hh"]
    H = emb.shape[1]
    hi = lax.Precision.HIGHEST

    def step(h, tok):
        x = emb[tok].reshape(1, H)
        gi = jnp.dot(x, W_ih.T, precision=hi) + b_ih
        gh = jnp.dot(h, W_hh.T, precision=hi) + b_hh
        r = jax.nn.sigmoid(gi[:, :H] + gh[:, :H])
        z = jax.nn.sigmoid(gi[:, H:2 * H] + gh[:, H:2 * H])
        n = jnp.tanh(gi[:, 2 * H:] + r * gh[:, 2 * H:])
        h_new = (1.0 - z) * n + z * h
        return h_new, h_new

    h0 = hidden.reshape(1, H).astype(jnp.float32)
    tokens = jnp.asarray(tokens, jnp.int32).reshape(-1)
    h_T, outs = lax.scan(step, h0, tokens)
    return outs.reshape(-1, 1, H), h_T.reshape(1, 1, H)


if __name__ == "__main__":
    vocab_size = 16     # input_size
    hidden_size = 32
    seq_len = 8

    key = jax.random.PRNGKey(0)
    params = init_params(key, vocab_size, hidden_size)
    tokens = jax.random.randint(jax.random.PRNGKey(1), (seq_len,), 0, vocab_size,
                                dtype=jnp.int32)
    hidden0 = jnp.zeros((1, 1, hidden_size), jnp.float32)        # initHidden()

    # Full-sequence run (one pallas_call for all steps).
    outputs, hidden_T = encoder_rnn_sequence(tokens, hidden0, params)
    outputs = jax.block_until_ready(outputs)
    hidden_T = jax.block_until_ready(hidden_T)

    ref_outputs, ref_hidden_T = reference_sequence(tokens, hidden0, params)
    assert outputs.shape == (seq_len, 1, hidden_size)
    assert hidden_T.shape == (1, 1, hidden_size)
    assert jnp.allclose(outputs, ref_outputs, atol=1e-3, rtol=1e-3), \
        float(jnp.max(jnp.abs(outputs - ref_outputs)))
    assert jnp.allclose(hidden_T, ref_hidden_T, atol=1e-3, rtol=1e-3)

    # Single-step forward, matching EncoderRNN.forward(input, hidden).
    out1, hid1 = encoder_rnn_forward(tokens[0], hidden0, params)
    out1 = jax.block_until_ready(out1)
    hid1 = jax.block_until_ready(hid1)
    ref_out1, ref_hid1 = reference_sequence(tokens[:1], hidden0, params)
    assert out1.shape == (1, 1, hidden_size)
    assert hid1.shape == (1, 1, hidden_size)
    assert jnp.allclose(out1, ref_out1, atol=1e-3, rtol=1e-3)
    assert jnp.allclose(hid1, ref_hid1, atol=1e-3, rtol=1e-3)

    print("KERNEL_OK")
</pallas_src>

<mosaic_0001>
module attributes {stable_mosaic.version = 11 : i64} {
  func.func @gru_seq_kernel(%arg0: memref<8x1xi32, #tpu.memory_space<vmem>>, %arg1: memref<16x128xbf16, #tpu.memory_space<vmem>>, %arg2: memref<1x128xf32, #tpu.memory_space<vmem>>, %arg3: memref<128x384xbf16, #tpu.memory_space<vmem>>, %arg4: memref<128x384xf32, #tpu.memory_space<vmem>>, %arg5: memref<1x384xf32, #tpu.memory_space<vmem>>, %arg6: memref<1x128xf32, #tpu.memory_space<vmem>>, %arg7: memref<8x128xf32, #tpu.memory_space<vmem>>, %arg8: memref<8x384xf32, #tpu.memory_space<vmem>>) attributes {dimension_semantics = [], scalar_prefetch = 0 : i64, scratch_operands = 1 : i64, tpu.core_type = #tpu.core_type<tc>} {
    %c0 = arith.constant 0 : index
    %c0_0 = arith.constant 0 : index
    %0 = vector.load %arg0[%c0, %c0_0] : memref<8x1xi32, #tpu.memory_space<vmem>>, vector<8x1xi32>
    %1 = tpu.iota {dimensions = array<i32: 1>} : vector<8x16xi32>
    %2 = vector.broadcast %0 : vector<8x1xi32> to vector<8x16xi32>
    %3 = arith.cmpi eq, %1, %2 : vector<8x16xi32>
    %4 = arith.extui %3 : vector<8x16xi1> to vector<8x16xi32>
    %5 = arith.sitofp %4 : vector<8x16xi32> to vector<8x16xf32>
    %6 = arith.truncf %5 : vector<8x16xf32> to vector<8x16xbf16>
    %c0_1 = arith.constant 0 : index
    %c0_2 = arith.constant 0 : index
    %7 = vector.load %arg1[%c0_1, %c0_2] : memref<16x128xbf16, #tpu.memory_space<vmem>>, vector<16x128xbf16>
    %cst = arith.constant dense<0.000000e+00> : vector<8x128xf32>
    %8 = tpu.matmul %6, %7, %cst {dimension_numbers = #tpu.dot_dimension_numbers<[1], [0], [0], [1], [0, 0, 1, 1], [], []>} : vector<8x16xbf16>, vector<16x128xbf16>, vector<8x128xf32> -> vector<8x128xf32>
    %9 = arith.truncf %8 : vector<8x128xf32> to vector<8x128xbf16>
    %c0_3 = arith.constant 0 : index
    %c0_4 = arith.constant 0 : index
    %10 = vector.load %arg3[%c0_3, %c0_4] : memref<128x384xbf16, #tpu.memory_space<vmem>>, vector<128x384xbf16>
    %cst_5 = arith.constant dense<0.000000e+00> : vector<8x384xf32>
    %11 = tpu.matmul %9, %10, %cst_5 {dimension_numbers = #tpu.dot_dimension_numbers<[1], [0], [0], [1], [0, 0, 1, 1], [], []>} : vector<8x128xbf16>, vector<128x384xbf16>, vector<8x384xf32> -> vector<8x384xf32>
    %c0_6 = arith.constant 0 : index
    %c0_7 = arith.constant 0 : index
    %12 = vector.load %arg5[%c0_6, %c0_7] : memref<1x384xf32, #tpu.memory_space<vmem>>, vector<1x384xf32>
    %13 = vector.broadcast %12 : vector<1x384xf32> to vector<8x384xf32>
    %14 = arith.addf %11, %13 : vector<8x384xf32>
    %c0_8 = arith.constant 0 : index
    %c0_9 = arith.constant 0 : index
    %15 = vector.load %arg8[%c0_8, %c0_9] : memref<8x384xf32, #tpu.memory_space<vmem>>, vector<8x384xf32>
    tpu.vector_store %arg8[%c0_8, %c0_9], %14 {strides = array<i32>} : memref<8x384xf32, #tpu.memory_space<vmem>>, vector<8x384xf32>,
    %c0_10 = arith.constant 0 : index
    %c0_11 = arith.constant 0 : index
    %16 = vector.load %arg4[%c0_10, %c0_11] : memref<128x384xf32, #tpu.memory_space<vmem>>, vector<128x384xf32>
    %c0_12 = arith.constant 0 : index
    %c0_13 = arith.constant 0 : index
    %17 = vector.load %arg6[%c0_12, %c0_13] : memref<1x128xf32, #tpu.memory_space<vmem>>, vector<1x128xf32>
    %cst_14 = arith.constant 0.000000e+00 : f32
    %18 = vector.broadcast %cst_14 : f32 to vector<8x128xf32>
    %c0_15 = arith.constant 0 : index
    %c0_16 = arith.constant 0 : index
    %19 = vector.load %arg7[%c0_15, %c0_16] : memref<8x128xf32, #tpu.memory_space<vmem>>, vector<8x128xf32>
    tpu.vector_store %arg7[%c0_15, %c0_16], %18 {strides = array<i32>} : memref<8x128xf32, #tpu.memory_space<vmem>>, vector<8x128xf32>,
    %c0_17 = arith.constant 0 : index
    %c0_18 = arith.constant 0 : index
    %20 = vector.load %arg2[%c0_17, %c0_18] : memref<1x128xf32, #tpu.memory_space<vmem>>, vector<1x128xf32>
    %c0_i32 = arith.constant 0 : i32
    %21 = arith.index_cast %c0_i32 : i32 to index
    %c0_19 = arith.constant 0 : index
    %22 = vector.load %arg8[%21, %c0_19] : memref<8x384xf32, #tpu.memory_space<vmem>>, vector<1x384xf32>
    %cst_20 = arith.constant dense<0.000000e+00> : vector<1x384xf32>
    %23 = tpu.matmul %20, %16, %cst_20 {dimension_numbers = #tpu.dot_dimension_numbers<[1], [0], [0], [1], [0, 0, 1, 1], [], []>} : vector<1x128xf32>, vector<128x384xf32>, vector<1x384xf32> -> vector<1x384xf32>
    %24 = vector.extract_strided_slice %22 {offsets = [0, 0], sizes = [1, 128], strides = [1, 1]} : vector<1x384xf32> to vector<1x128xf32>
    %25 = vector.extract_strided_slice %23 {offsets = [0, 0], sizes = [1, 128], strides = [1, 1]} : vector<1x384xf32> to vector<1x128xf32>
    %26 = arith.addf %24, %25 : vector<1x128xf32>
    %27 = arith.negf %26 : vector<1x128xf32>
    %28 = math.exp %27 : vector<1x128xf32>
    %cst_21 = arith.constant 1.000000e+00 : f32
    %29 = vector.broadcast %cst_21 : f32 to vector<1x128xf32>
    %30 = arith.addf %29, %28 : vector<1x128xf32>
    %31 = arith.divf %29, %30 : vector<1x128xf32>
    %32 = vector.extract_strided_slice %22 {offsets = [0, 128], sizes = [1, 128], strides = [1, 1]} : vector<1x384xf32> to vector<1x128xf32>
    %33 = vector.extract_strided_slice %23 {offsets = [0, 128], sizes = [1, 128], strides = [1, 1]} : vector<1x384xf32> to vector<1x128xf32>
    %34 = arith.addf %32, %33 : vector<1x128xf32>
    %35 = arith.negf %34 : vector<1x128xf32>
    %36 = math.exp %35 : vector<1x128xf32>
    %cst_22 = arith.constant 1.000000e+00 : f32
    %37 = vector.broadcast %cst_22 : f32 to vector<1x128xf32>
    %38 = arith.addf %37, %36 : vector<1x128xf32>
    %39 = arith.divf %37, %38 : vector<1x128xf32>
    %40 = vector.extract_strided_slice %22 {offsets = [0, 256], sizes = [1, 128], strides = [1, 1]} : vector<1x384xf32> to vector<1x128xf32>
    %41 = vector.extract_strided_slice %23 {offsets = [0, 256], sizes = [1, 128], strides = [1, 1]} : vector<1x384xf32> to vector<1x128xf32>
    %42 = arith.addf %41, %17 : vector<1x128xf32>
    %43 = arith.mulf %31, %42 : vector<1x128xf32>
    %44 = arith.addf %40, %43 : vector<1x128xf32>
    %45 = math.tanh %44 : vector<1x128xf32>
    %cst_23 = arith.constant 1.000000e+00 : f32
    %46 = vector.broadcast %cst_23 : f32 to vector<1x128xf32>
    %47 = arith.subf %46, %39 : vector<1x128xf32>
    %48 = arith.mulf %47, %45 : vector<1x128xf32>
    %49 = arith.mulf %39, %20 : vector<1x128xf32>
    %50 = arith.addf %48, %49 : vector<1x128xf32>
    %51 = arith.index_cast %c0_i32 : i32 to index
    %c0_24 = arith.constant 0 : index
    %52 = vector.load %arg7[%51, %c0_24] : memref<8x128xf32, #tpu.memory_space<vmem>>, vector<1x128xf32>
    tpu.vector_store %arg7[%51, %c0_24], %50 {strides = array<i32>} : memref<8x128xf32, #tpu.memory_space<vmem>>, vector<1x128xf32>,
    %c1_i32 = arith.constant 1 : i32
    %53 = arith.index_cast %c1_i32 : i32 to index
    %c0_25 = arith.constant 0 : index
    %54 = vector.load %arg8[%53, %c0_25] : memref<8x384xf32, #tpu.memory_space<vmem>>, vector<1x384xf32>
    %cst_26 = arith.constant dense<0.000000e+00> : vector<1x384xf32>
    %55 = tpu.matmul %50, %16, %cst_26 {dimension_numbers = #tpu.dot_dimension_numbers<[1], [0], [0], [1], [0, 0, 1, 1], [], []>} : vector<1x128xf32>, vector<128x384xf32>, vector<1x384xf32> -> vector<1x384xf32>
    %56 = vector.extract_strided_slice %54 {offsets = [0, 0], sizes = [1, 128], strides = [1, 1]} : vector<1x384xf32> to vector<1x128xf32>
    %57 = vector.extract_strided_slice %55 {offsets = [0, 0], sizes = [1, 128], strides = [1, 1]} : vector<1x384xf32> to vector<1x128xf32>
    %58 = arith.addf %56, %57 : vector<1x128xf32>
    %59 = arith.negf %58 : vector<1x128xf32>
    %60 = math.exp %59 : vector<1x128xf32>
    %cst_27 = arith.constant 1.000000e+00 : f32
    %61 = vector.broadcast %cst_27 : f32 to vector<1x128xf32>
    %62 = arith.addf %61, %60 : vector<1x128xf32>
    %63 = arith.divf %61, %62 : vector<1x128xf32>
    %64 = vector.extract_strided_slice %54 {offsets = [0, 128], sizes = [1, 128], strides = [1, 1]} : vector<1x384xf32> to vector<1x128xf32>
    %65 = vector.extract_strided_slice %55 {offsets = [0, 128], sizes = [1, 128], strides = [1, 1]} : vector<1x384xf32> to vector<1x128xf32>
    %66 = arith.addf %64, %65 : vector<1x128xf32>
    %67 = arith.negf %66 : vector<1x128xf32>
    %68 = math.exp %67 : vector<1x128xf32>
    %cst_28 = arith.constant 1.000000e+00 : f32
    %69 = vector.broadcast %cst_28 : f32 to vector<1x128xf32>
    %70 = arith.addf %69, %68 : vector<1x128xf32>
    %71 = arith.divf %69, %70 : vector<1x128xf32>
    %72 = vector.extract_strided_slice %54 {offsets = [0, 256], sizes = [1, 128], strides = [1, 1]} : vector<1x384xf32> to vector<1x128xf32>
    %73 = vector.extract_strided_slice %55 {offsets = [0, 256], sizes = [1, 128], strides = [1, 1]} : vector<1x384xf32> to vector<1x128xf32>
    %74 = arith.addf %73, %17 : vector<1x128xf32>
    %75 = arith.mulf %63, %74 : vector<1x128xf32>
    %76 = arith.addf %72, %75 : vector<1x128xf32>
    %77 = math.tanh %76 : vector<1x128xf32>
    %cst_29 = arith.constant 1.000000e+00 : f32
    %78 = vector.broadcast %cst_29 : f32 to vector<1x128xf32>
    %79 = arith.subf %78, %71 : vector<1x128xf32>
    %80 = arith.mulf %79, %77 : vector<1x128xf32>
    %81 = arith.mulf %71, %50 : vector<1x128xf32>
    %82 = arith.addf %80, %81 : vector<1x128xf32>
    %83 = arith.index_cast %c1_i32 : i32 to index
    %c0_30 = arith.constant 0 : index
    %84 = vector.load %arg7[%83, %c0_30] : memref<8x128xf32, #tpu.memory_space<vmem>>, vector<1x128xf32>
    tpu.vector_store %arg7[%83, %c0_30], %82 {strides = array<i32>} : memref<8x128xf32, #tpu.memory_space<vmem>>, vector<1x128xf32>,
    %c2_i32 = arith.constant 2 : i32
    %85 = arith.index_cast %c2_i32 : i32 to index
    %c0_31 = arith.constant 0 : index
    %86 = vector.load %arg8[%85, %c0_31] : memref<8x384xf32, #tpu.memory_space<vmem>>, vector<1x384xf32>
    %cst_32 = arith.constant dense<0.000000e+00> : vector<1x384xf32>
    %87 = tpu.matmul %82, %16, %cst_32 {dimension_numbers = #tpu.dot_dimension_numbers<[1], [0], [0], [1], [0, 0, 1, 1], [], []>} : vector<1x128xf32>, vector<128x384xf32>, vector<1x384xf32> -> vector<1x384xf32>
    %88 = vector.extract_strided_slice %86 {offsets = [0, 0], sizes = [1, 128], strides = [1, 1]} : vector<1x384xf32> to vector<1x128xf32>
    %89 = vector.extract_strided_slice %87 {offsets = [0, 0], sizes = [1, 128], strides = [1, 1]} : vector<1x384xf32> to vector<1x128xf32>
    %90 = arith.addf %88, %89 : vector<1x128xf32>
    %91 = arith.negf %90 : vector<1x128xf32>
    %92 = math.exp %91 : vector<1x128xf32>
    %cst_33 = arith.constant 1.000000e+00 : f32
    %93 = vector.broadcast %cst_33 : f32 to vector<1x128xf32>
    %94 = arith.addf %93, %92 : vector<1x128xf32>
    %95 = arith.divf %93, %94 : vector<1x128xf32>
    %96 = vector.extract_strided_slice %86 {offsets = [0, 128], sizes = [1, 128], strides = [1, 1]} : vector<1x384xf32> to vector<1x128xf32>
    %97 = vector.extract_strided_slice %87 {offsets = [0, 128], sizes = [1, 128], strides = [1, 1]} : vector<1x384xf32> to vector<1x128xf32>
    %98 = arith.addf %96, %97 : vector<1x128xf32>
    %99 = arith.negf %98 : vector<1x128xf32>
    %100 = math.exp %99 : vector<1x128xf32>
    %cst_34 = arith.constant 1.000000e+00 : f32
    %101 = vector.broadcast %cst_34 : f32 to vector<1x128xf32>
    %102 = arith.addf %101, %100 : vector<1x128xf32>
    %103 = arith.divf %101, %102 : vector<1x128xf32>
    %104 = vector.extract_strided_slice %86 {offsets = [0, 256], sizes = [1, 128], strides = [1, 1]} : vector<1x384xf32> to vector<1x128xf32>
    %105 = vector.extract_strided_slice %87 {offsets = [0, 256], sizes = [1, 128], strides = [1, 1]} : vector<1x384xf32> to vector<1x128xf32>
    %106 = arith.addf %105, %17 : vector<1x128xf32>
    %107 = arith.mulf %95, %106 : vector<1x128xf32>
    %108 = arith.addf %104, %107 : vector<1x128xf32>
    %109 = math.tanh %108 : vector<1x128xf32>
    %cst_35 = arith.constant 1.000000e+00 : f32
    %110 = vector.broadcast %cst_35 : f32 to vector<1x128xf32>
    %111 = arith.subf %110, %103 : vector<1x128xf32>
    %112 = arith.mulf %111, %109 : vector<1x128xf32>
    %113 = arith.mulf %103, %82 : vector<1x128xf32>
    %114 = arith.addf %112, %113 : vector<1x128xf32>
    %115 = arith.index_cast %c2_i32 : i32 to index
    %c0_36 = arith.constant 0 : index
    %116 = vector.load %arg7[%115, %c0_36] : memref<8x128xf32, #tpu.memory_space<vmem>>, vector<1x128xf32>
    tpu.vector_store %arg7[%115, %c0_36], %114 {strides = array<i32>} : memref<8x128xf32, #tpu.memory_space<vmem>>, vector<1x128xf32>,
    %c3_i32 = arith.constant 3 : i32
    %117 = arith.index_cast %c3_i32 : i32 to index
    %c0_37 = arith.constant 0 : index
    %118 = vector.load %arg8[%117, %c0_37] : memref<8x384xf32, #tpu.memory_space<vmem>>, vector<1x384xf32>
    %cst_38 = arith.constant dense<0.000000e+00> : vector<1x384xf32>
    %119 = tpu.matmul %114, %16, %cst_38 {dimension_numbers = #tpu.dot_dimension_numbers<[1], [0], [0], [1], [0, 0, 1, 1], [], []>} : vector<1x128xf32>, vector<128x384xf32>, vector<1x384xf32> -> vector<1x384xf32>
    %120 = vector.extract_strided_slice %118 {offsets = [0, 0], sizes = [1, 128], strides = [1, 1]} : vector<1x384xf32> to vector<1x128xf32>
    %121 = vector.extract_strided_slice %119 {offsets = [0, 0], sizes = [1, 128], strides = [1, 1]} : vector<1x384xf32> to vector<1x128xf32>
    %122 = arith.addf %120, %121 : vector<1x128xf32>
    %123 = arith.negf %122 : vector<1x128xf32>
    %124 = math.exp %123 : vector<1x128xf32>
    %cst_39 = arith.constant 1.000000e+00 : f32
    %125 = vector.broadcast %cst_39 : f32 to vector<1x128xf32>
    %126 = arith.addf %125, %124 : vector<1x128xf32>
    %127 = arith.divf %125, %126 : vector<1x128xf32>
    %128 = vector.extract_strided_slice %118 {offsets = [0, 128], sizes = [1, 128], strides = [1, 1]} : vector<1x384xf32> to vector<1x128xf32>
    %129 = vector.extract_strided_slice %119 {offsets = [0, 128], sizes = [1, 128], strides = [1, 1]} : vector<1x384xf32> to vector<1x128xf32>
    %130 = arith.addf %128, %129 : vector<1x128xf32>
    %131 = arith.negf %130 : vector<1x128xf32>
    %132 = math.exp %131 : vector<1x128xf32>
    %cst_40 = arith.constant 1.000000e+00 : f32
    %133 = vector.broadcast %cst_40 : f32 to vector<1x128xf32>
    %134 = arith.addf %133, %132 : vector<1x128xf32>
    %135 = arith.divf %133, %134 : vector<1x128xf32>
    %136 = vector.extract_strided_slice %118 {offsets = [0, 256], sizes = [1, 128], strides = [1, 1]} : vector<1x384xf32> to vector<1x128xf32>
    %137 = vector.extract_strided_slice %119 {offsets = [0, 256], sizes = [1, 128], strides = [1, 1]} : vector<1x384xf32> to vector<1x128xf32>
    %138 = arith.addf %137, %17 : vector<1x128xf32>
    %139 = arith.mulf %127, %138 : vector<1x128xf32>
    %140 = arith.addf %136, %139 : vector<1x128xf32>
    %141 = math.tanh %140 : vector<1x128xf32>
    %cst_41 = arith.constant 1.000000e+00 : f32
    %142 = vector.broadcast %cst_41 : f32 to vector<1x128xf32>
    %143 = arith.subf %142, %135 : vector<1x128xf32>
    %144 = arith.mulf %143, %141 : vector<1x128xf32>
    %145 = arith.mulf %135, %114 : vector<1x128xf32>
    %146 = arith.addf %144, %145 : vector<1x128xf32>
    %147 = arith.index_cast %c3_i32 : i32 to index
    %c0_42 = arith.constant 0 : index
    %148 = vector.load %arg7[%147, %c0_42] : memref<8x128xf32, #tpu.memory_space<vmem>>, vector<1x128xf32>
    tpu.vector_store %arg7[%147, %c0_42], %146 {strides = array<i32>} : memref<8x128xf32, #tpu.memory_space<vmem>>, vector<1x128xf32>,
    %c4_i32 = arith.constant 4 : i32
    %149 = arith.index_cast %c4_i32 : i32 to index
    %c0_43 = arith.constant 0 : index
    %150 = vector.load %arg8[%149, %c0_43] : memref<8x384xf32, #tpu.memory_space<vmem>>, vector<1x384xf32>
    %cst_44 = arith.constant dense<0.000000e+00> : vector<1x384xf32>
    %151 = tpu.matmul %146, %16, %cst_44 {dimension_numbers = #tpu.dot_dimension_numbers<[1], [0], [0], [1], [0, 0, 1, 1], [], []>} : vector<1x128xf32>, vector<128x384xf32>, vector<1x384xf32> -> vector<1x384xf32>
    %152 = vector.extract_strided_slice %150 {offsets = [0, 0], sizes = [1, 128], strides = [1, 1]} : vector<1x384xf32> to vector<1x128xf32>
    %153 = vector.extract_strided_slice %151 {offsets = [0, 0], sizes = [1, 128], strides = [1, 1]} : vector<1x384xf32> to vector<1x128xf32>
    %154 = arith.addf %152, %153 : vector<1x128xf32>
    %155 = arith.negf %154 : vector<1x128xf32>
    %156 = math.exp %155 : vector<1x128xf32>
    %cst_45 = arith.constant 1.000000e+00 : f32
    %157 = vector.broadcast %cst_45 : f32 to vector<1x128xf32>
    %158 = arith.addf %157, %156 : vector<1x128xf32>
    %159 = arith.divf %157, %158 : vector<1x128xf32>
    %160 = vector.extract_strided_slice %150 {offsets = [0, 128], sizes = [1, 128], strides = [1, 1]} : vector<1x384xf32> to vector<1x128xf32>
    %161 = vector.extract_strided_slice %151 {offsets = [0, 128], sizes = [1, 128], strides = [1, 1]} : vector<1x384xf32> to vector<1x128xf32>
    %162 = arith.addf %160, %161 : vector<1x128xf32>
    %163 = arith.negf %162 : vector<1x128xf32>
    %164 = math.exp %163 : vector<1x128xf32>
    %cst_46 = arith.constant 1.000000e+00 : f32
    %165 = vector.broadcast %cst_46 : f32 to vector<1x128xf32>
    %166 = arith.addf %165, %164 : vector<1x128xf32>
    %167 = arith.divf %165, %166 : vector<1x128xf32>
    %168 = vector.extract_strided_slice %150 {offsets = [0, 256], sizes = [1, 128], strides = [1, 1]} : vector<1x384xf32> to vector<1x128xf32>
    %169 = vector.extract_strided_slice %151 {offsets = [0, 256], sizes = [1, 128], strides = [1, 1]} : vector<1x384xf32> to vector<1x128xf32>
    %170 = arith.addf %169, %17 : vector<1x128xf32>
    %171 = arith.mulf %159, %170 : vector<1x128xf32>
    %172 = arith.addf %168, %171 : vector<1x128xf32>
    %173 = math.tanh %172 : vector<1x128xf32>
    %cst_47 = arith.constant 1.000000e+00 : f32
    %174 = vector.broadcast %cst_47 : f32 to vector<1x128xf32>
    %175 = arith.subf %174, %167 : vector<1x128xf32>
    %176 = arith.mulf %175, %173 : vector<1x128xf32>
    %177 = arith.mulf %167, %146 : vector<1x128xf32>
    %178 = arith.addf %176, %177 : vector<1x128xf32>
    %179 = arith.index_cast %c4_i32 : i32 to index
    %c0_48 = arith.constant 0 : index
    %180 = vector.load %arg7[%179, %c0_48] : memref<8x128xf32, #tpu.memory_space<vmem>>, vector<1x128xf32>
    tpu.vector_store %arg7[%179, %c0_48], %178 {strides = array<i32>} : memref<8x128xf32, #tpu.memory_space<vmem>>, vector<1x128xf32>,
    %c5_i32 = arith.constant 5 : i32
    %181 = arith.index_cast %c5_i32 : i32 to index
    %c0_49 = arith.constant 0 : index
    %182 = vector.load %arg8[%181, %c0_49] : memref<8x384xf32, #tpu.memory_space<vmem>>, vector<1x384xf32>
    %cst_50 = arith.constant dense<0.000000e+00> : vector<1x384xf32>
    %183 = tpu.matmul %178, %16, %cst_50 {dimension_numbers = #tpu.dot_dimension_numbers<[1], [0], [0], [1], [0, 0, 1, 1], [], []>} : vector<1x128xf32>, vector<128x384xf32>, vector<1x384xf32> -> vector<1x384xf32>
    %184 = vector.extract_strided_slice %182 {offsets = [0, 0], sizes = [1, 128], strides = [1, 1]} : vector<1x384xf32> to vector<1x128xf32>
    %185 = vector.extract_strided_slice %183 {offsets = [0, 0], sizes = [1, 128], strides = [1, 1]} : vector<1x384xf32> to vector<1x128xf32>
    %186 = arith.addf %184, %185 : vector<1x128xf32>
    %187 = arith.negf %186 : vector<1x128xf32>
    %188 = math.exp %187 : vector<1x128xf32>
    %cst_51 = arith.constant 1.000000e+00 : f32
    %189 = vector.broadcast %cst_51 : f32 to vector<1x128xf32>
    %190 = arith.addf %189, %188 : vector<1x128xf32>
    %191 = arith.divf %189, %190 : vector<1x128xf32>
    %192 = vector.extract_strided_slice %182 {offsets = [0, 128], sizes = [1, 128], strides = [1, 1]} : vector<1x384xf32> to vector<1x128xf32>
    %193 = vector.extract_strided_slice %183 {offsets = [0, 128], sizes = [1, 128], strides = [1, 1]} : vector<1x384xf32> to vector<1x128xf32>
    %194 = arith.addf %192, %193 : vector<1x128xf32>
    %195 = arith.negf %194 : vector<1x128xf32>
    %196 = math.exp %195 : vector<1x128xf32>
    %cst_52 = arith.constant 1.000000e+00 : f32
    %197 = vector.broadcast %cst_52 : f32 to vector<1x128xf32>
    %198 = arith.addf %197, %196 : vector<1x128xf32>
    %199 = arith.divf %197, %198 : vector<1x128xf32>
    %200 = vector.extract_strided_slice %182 {offsets = [0, 256], sizes = [1, 128], strides = [1, 1]} : vector<1x384xf32> to vector<1x128xf32>
    %201 = vector.extract_strided_slice %183 {offsets = [0, 256], sizes = [1, 128], strides = [1, 1]} : vector<1x384xf32> to vector<1x128xf32>
    %202 = arith.addf %201, %17 : vector<1x128xf32>
    %203 = arith.mulf %191, %202 : vector<1x128xf32>
    %204 = arith.addf %200, %203 : vector<1x128xf32>
    %205 = math.tanh %204 : vector<1x128xf32>
    %cst_53 = arith.constant 1.000000e+00 : f32
    %206 = vector.broadcast %cst_53 : f32 to vector<1x128xf32>
    %207 = arith.subf %206, %199 : vector<1x128xf32>
    %208 = arith.mulf %207, %205 : vector<1x128xf32>
    %209 = arith.mulf %199, %178 : vector<1x128xf32>
    %210 = arith.addf %208, %209 : vector<1x128xf32>
    %211 = arith.index_cast %c5_i32 : i32 to index
    %c0_54 = arith.constant 0 : index
    %212 = vector.load %arg7[%211, %c0_54] : memref<8x128xf32, #tpu.memory_space<vmem>>, vector<1x128xf32>
    tpu.vector_store %arg7[%211, %c0_54], %210 {strides = array<i32>} : memref<8x128xf32, #tpu.memory_space<vmem>>, vector<1x128xf32>,
    %c6_i32 = arith.constant 6 : i32
    %213 = arith.index_cast %c6_i32 : i32 to index
    %c0_55 = arith.constant 0 : index
    %214 = vector.load %arg8[%213, %c0_55] : memref<8x384xf32, #tpu.memory_space<vmem>>, vector<1x384xf32>
    %cst_56 = arith.constant dense<0.000000e+00> : vector<1x384xf32>
    %215 = tpu.matmul %210, %16, %cst_56 {dimension_numbers = #tpu.dot_dimension_numbers<[1], [0], [0], [1], [0, 0, 1, 1], [], []>} : vector<1x128xf32>, vector<128x384xf32>, vector<1x384xf32> -> vector<1x384xf32>
    %216 = vector.extract_strided_slice %214 {offsets = [0, 0], sizes = [1, 128], strides = [1, 1]} : vector<1x384xf32> to vector<1x128xf32>
    %217 = vector.extract_strided_slice %215 {offsets = [0, 0], sizes = [1, 128], strides = [1, 1]} : vector<1x384xf32> to vector<1x128xf32>
    %218 = arith.addf %216, %217 : vector<1x128xf32>
    %219 = arith.negf %218 : vector<1x128xf32>
    %220 = math.exp %219 : vector<1x128xf32>
    %cst_57 = arith.constant 1.000000e+00 : f32
    %221 = vector.broadcast %cst_57 : f32 to vector<1x128xf32>
    %222 = arith.addf %221, %220 : vector<1x128xf32>
    %223 = arith.divf %221, %222 : vector<1x128xf32>
    %224 = vector.extract_strided_slice %214 {offsets = [0, 128], sizes = [1, 128], strides = [1, 1]} : vector<1x384xf32> to vector<1x128xf32>
    %225 = vector.extract_strided_slice %215 {offsets = [0, 128], sizes = [1, 128], strides = [1, 1]} : vector<1x384xf32> to vector<1x128xf32>
    %226 = arith.addf %224, %225 : vector<1x128xf32>
    %227 = arith.negf %226 : vector<1x128xf32>
    %228 = math.exp %227 : vector<1x128xf32>
    %cst_58 = arith.constant 1.000000e+00 : f32
    %229 = vector.broadcast %cst_58 : f32 to vector<1x128xf32>
    %230 = arith.addf %229, %228 : vector<1x128xf32>
    %231 = arith.divf %229, %230 : vector<1x128xf32>
    %232 = vector.extract_strided_slice %214 {offsets = [0, 256], sizes = [1, 128], strides = [1, 1]} : vector<1x384xf32> to vector<1x128xf32>
    %233 = vector.extract_strided_slice %215 {offsets = [0, 256], sizes = [1, 128], strides = [1, 1]} : vector<1x384xf32> to vector<1x128xf32>
    %234 = arith.addf %233, %17 : vector<1x128xf32>
    %235 = arith.mulf %223, %234 : vector<1x128xf32>
    %236 = arith.addf %232, %235 : vector<1x128xf32>
    %237 = math.tanh %236 : vector<1x128xf32>
    %cst_59 = arith.constant 1.000000e+00 : f32
    %238 = vector.broadcast %cst_59 : f32 to vector<1x128xf32>
    %239 = arith.subf %238, %231 : vector<1x128xf32>
    %240 = arith.mulf %239, %237 : vector<1x128xf32>
    %241 = arith.mulf %231, %210 : vector<1x128xf32>
    %242 = arith.addf %240, %241 : vector<1x128xf32>
    %243 = arith.index_cast %c6_i32 : i32 to index
    %c0_60 = arith.constant 0 : index
    %244 = vector.load %arg7[%243, %c0_60] : memref<8x128xf32, #tpu.memory_space<vmem>>, vector<1x128xf32>
    tpu.vector_store %arg7[%243, %c0_60], %242 {strides = array<i32>} : memref<8x128xf32, #tpu.memory_space<vmem>>, vector<1x128xf32>,
    %c7_i32 = arith.constant 7 : i32
    %245 = arith.index_cast %c7_i32 : i32 to index
    %c0_61 = arith.constant 0 : index
    %246 = vector.load %arg8[%245, %c0_61] : memref<8x384xf32, #tpu.memory_space<vmem>>, vector<1x384xf32>
    %cst_62 = arith.constant dense<0.000000e+00> : vector<1x384xf32>
    %247 = tpu.matmul %242, %16, %cst_62 {dimension_numbers = #tpu.dot_dimension_numbers<[1], [0], [0], [1], [0, 0, 1, 1], [], []>} : vector<1x128xf32>, vector<128x384xf32>, vector<1x384xf32> -> vector<1x384xf32>
    %248 = vector.extract_strided_slice %246 {offsets = [0, 0], sizes = [1, 128], strides = [1, 1]} : vector<1x384xf32> to vector<1x128xf32>
    %249 = vector.extract_strided_slice %247 {offsets = [0, 0], sizes = [1, 128], strides = [1, 1]} : vector<1x384xf32> to vector<1x128xf32>
    %250 = arith.addf %248, %249 : vector<1x128xf32>
    %251 = arith.negf %250 : vector<1x128xf32>
    %252 = math.exp %251 : vector<1x128xf32>
    %cst_63 = arith.constant 1.000000e+00 : f32
    %253 = vector.broadcast %cst_63 : f32 to vector<1x128xf32>
    %254 = arith.addf %253, %252 : vector<1x128xf32>
    %255 = arith.divf %253, %254 : vector<1x128xf32>
    %256 = vector.extract_strided_slice %246 {offsets = [0, 128], sizes = [1, 128], strides = [1, 1]} : vector<1x384xf32> to vector<1x128xf32>
    %257 = vector.extract_strided_slice %247 {offsets = [0, 128], sizes = [1, 128], strides = [1, 1]} : vector<1x384xf32> to vector<1x128xf32>
    %258 = arith.addf %256, %257 : vector<1x128xf32>
    %259 = arith.negf %258 : vector<1x128xf32>
    %260 = math.exp %259 : vector<1x128xf32>
    %cst_64 = arith.constant 1.000000e+00 : f32
    %261 = vector.broadcast %cst_64 : f32 to vector<1x128xf32>
    %262 = arith.addf %261, %260 : vector<1x128xf32>
    %263 = arith.divf %261, %262 : vector<1x128xf32>
    %264 = vector.extract_strided_slice %246 {offsets = [0, 256], sizes = [1, 128], strides = [1, 1]} : vector<1x384xf32> to vector<1x128xf32>
    %265 = vector.extract_strided_slice %247 {offsets = [0, 256], sizes = [1, 128], strides = [1, 1]} : vector<1x384xf32> to vector<1x128xf32>
    %266 = arith.addf %265, %17 : vector<1x128xf32>
    %267 = arith.mulf %255, %266 : vector<1x128xf32>
    %268 = arith.addf %264, %267 : vector<1x128xf32>
    %269 = math.tanh %268 : vector<1x128xf32>
    %cst_65 = arith.constant 1.000000e+00 : f32
    %270 = vector.broadcast %cst_65 : f32 to vector<1x128xf32>
    %271 = arith.subf %270, %263 : vector<1x128xf32>
    %272 = arith.mulf %271, %269 : vector<1x128xf32>
    %273 = arith.mulf %263, %242 : vector<1x128xf32>
    %274 = arith.addf %272, %273 : vector<1x128xf32>
    %275 = arith.index_cast %c7_i32 : i32 to index
    %c0_66 = arith.constant 0 : index
    %276 = vector.load %arg7[%275, %c0_66] : memref<8x128xf32, #tpu.memory_space<vmem>>, vector<1x128xf32>
    tpu.vector_store %arg7[%275, %c0_66], %274 {strides = array<i32>} : memref<8x128xf32, #tpu.memory_space<vmem>>, vector<1x128xf32>,
    %c8_i32 = arith.constant 8 : i32
    return
  }
}

</mosaic_0001>

<llo_original>
// kernel: tpu_custom_call.1
$region0: #{tpu_custom_call.1}
  #allocation0 [shape = 'u32[]', space=smem, size = 0x4, offset = 0x4, fixed_abs, tag = 'smem constant byte address 0x4 - core index']
  #allocation1 [shape = 'u32[72,128]{1,0:T(1,128)}', space=vmem, size = 0x9000, scoped, tag = 'internal scratch']
  #allocation2 [shape = 'f32[8,384]{1,0:T(8,128)}', space=vmem, size = 0x3000, scoped, tag = 'scratch operand']
  %s0 = inlined_call_operand.vmem [shape: s32[8,1], index: 0, kind: input, shape index: {}]
  %s1 = inlined_call_operand.vmem [shape: bf16[16,128], index: 1, kind: input, shape index: {}]
  %s2 = inlined_call_operand.hbm [shape: f32[1,128], index: 2, kind: input, shape index: {}]
  %s3 = inlined_call_operand.hbm [shape: bf16[128,384], index: 3, kind: input, shape index: {}]
  %s4 = inlined_call_operand.hbm [shape: f32[128,384], index: 4, kind: input, shape index: {}]
  %s5 = inlined_call_operand.vmem [shape: f32[1,384], index: 5, kind: input, shape index: {}]
  %s6 = inlined_call_operand.vmem [shape: f32[1,128], index: 6, kind: input, shape index: {}]
  %s7 = inlined_call_operand.hbm [shape: f32[8,128], index: 7, kind: output, shape index: {}]
  %s8 = sld [smem:[#allocation0]]
  $region50: #{tpu_custom_call.1} parent=0
    _
  %s10 = ssub.s32 1, %s8
  %s11 = scalar_select 0, %s10, %s8
  $region1: #{tpu_custom_call.1} parent=0
    #allocation3 [shape = 'u8[512]{0}', space=vmem, size = 0x400, scoped, tag = 'input window, operand 2, single buffered']
    #allocation4 [shape = 's32[1]{0}', space=sflag, size = 0x4, scoped, tag = 'scoped memory for tpu_custom_call.1']
    #allocation5 [shape = 's32[1]{0}', space=sflag, size = 0x4, scoped, tag = 'scoped memory for tpu_custom_call.1']
    #allocation6 [shape = 'u8[98304]{0}', space=vmem, size = 0x18000, scoped, tag = 'input window, operand 3, single buffered']
    #allocation7 [shape = 's32[1]{0}', space=sflag, size = 0x4, scoped, tag = 'scoped memory for tpu_custom_call.1']
    #allocation8 [shape = 'u8[196608]{0}', space=vmem, size = 0x30000, scoped, tag = 'input window, operand 4, single buffered']
    #allocation9 [shape = 'u8[4096]{0}', space=vmem, size = 0x1000, scoped, tag = 'output window, operand 0, single buffered']
    %12 = vsyncpa [#allocation4], 0
    %13 = vsyncpa [#allocation7], 0
    %14 = vsyncpa [#allocation5], 0
    // Predicated region
    $region2: #{tpu_custom_call.1} parent=1 // pred_check
      _
    $region3: #{tpu_custom_call.1} parent=1 // pred_check_branch
      %16 = sbr.rel (0) target = $region5
    $region4: #{tpu_custom_call.1} parent=1 // pred_region
      _
    $region5: #{tpu_custom_call.1} parent=1 // pred_fallthru
      _
    // Predicated region
    $region6: #{tpu_custom_call.1} parent=1 // pred_check
      _
    $region7: #{tpu_custom_call.1} parent=1 // pred_check_branch
      %18 = sbr.rel (0) target = $region9
    $region8: #{tpu_custom_call.1} parent=1 // pred_region
      _
    $region9: #{tpu_custom_call.1} parent=1 // pred_fallthru
      _
    // Predicated region
    $region10: #{tpu_custom_call.1} parent=1 // pred_check
      _
    $region11: #{tpu_custom_call.1} parent=1 // pred_check_branch
      %20 = sbr.rel (0) target = $region13
    $region12: #{tpu_custom_call.1} parent=1 // pred_region
      %22 = vsyncadd [#allocation4], 0
      %s24 = sshll.u32 %s2, 4
      %s25 = int_to_ptr.hbm [resolvable:$true] %s24
      %s26 = sshll.u32 [#allocation3], 4
      %s27 = int_to_ptr.vmem [resolvable:$true] %s26
      %29 = dma.hbm_to_vmem [thread:$0]  %s25, 16, %s27, [#allocation4]
    $region13: #{tpu_custom_call.1} parent=1 // pred_fallthru
      _
    // Predicated region
    $region14: #{tpu_custom_call.1} parent=1 // pred_check
      _
    $region15: #{tpu_custom_call.1} parent=1 // pred_check_branch
      %31 = sbr.rel (0) target = $region17
    $region16: #{tpu_custom_call.1} parent=1 // pred_region
      %33 = vsyncadd [#allocation7], 0
      %s34 = sshll.u32 %s3, 4
      %s35 = int_to_ptr.hbm [resolvable:$true] %s34
      %s36 = sshll.u32 [#allocation6], 4
      %s37 = int_to_ptr.vmem [resolvable:$true] %s36
      %42 = dma.hbm_to_vmem [thread:$0]  %s35, 3072, %s37, [#allocation7], 192, 192, 12
    $region17: #{tpu_custom_call.1} parent=1 // pred_fallthru
      _
    // Predicated region
    $region18: #{tpu_custom_call.1} parent=1 // pred_check
      _
    $region19: #{tpu_custom_call.1} parent=1 // pred_check_branch
      %44 = sbr.rel (0) target = $region21
    $region20: #{tpu_custom_call.1} parent=1 // pred_region
      %46 = vsyncadd [#allocation7], 0
      %s47 = sshll.u32 %s4, 4
      %s48 = int_to_ptr.hbm [resolvable:$true] %s47
      %s49 = sshll.u32 [#allocation8], 4
      %s50 = int_to_ptr.vmem [resolvable:$true] %s49
      %55 = dma.hbm_to_vmem [thread:$0]  %s48, 6144, %s50, [#allocation7], 384, 384, 24
    $region21: #{tpu_custom_call.1} parent=1 // pred_fallthru
      _
    // Predicated region
    $region22: #{tpu_custom_call.1} parent=1 // pred_check
      _
    $region23: #{tpu_custom_call.1} parent=1 // pred_check_branch
      %57 = sbr.rel (0) target = $region25
    $region24: #{tpu_custom_call.1} parent=1 // pred_region
      _
    $region25: #{tpu_custom_call.1} parent=1 // pred_fallthru
      _
    // Predicated region
    $region26: #{tpu_custom_call.1} parent=1 // pred_check
      _
    $region27: #{tpu_custom_call.1} parent=1 // pred_check_branch
      %59 = sbr.rel (0) target = $region29
    $region28: #{tpu_custom_call.1} parent=1 // pred_region
      _
    $region29: #{tpu_custom_call.1} parent=1 // pred_fallthru
      _
    // Predicated region
    $region30: #{tpu_custom_call.1} parent=1 // pred_check
      _
    $region31: #{tpu_custom_call.1} parent=1 // pred_check_branch
      %61 = sbr.rel (0) target = $region33
    $region32: #{tpu_custom_call.1} parent=1 // pred_region
      %63 = dma.done [#allocation4], 16
    $region33: #{tpu_custom_call.1} parent=1 // pred_fallthru
      _
    // Predicated region
    $region34: #{tpu_custom_call.1} parent=1 // pred_check
      _
    $region35: #{tpu_custom_call.1} parent=1 // pred_check_branch
      %65 = sbr.rel (0) target = $region37
    $region36: #{tpu_custom_call.1} parent=1 // pred_region
      %67 = dma.done [#allocation7], 3072
    $region37: #{tpu_custom_call.1} parent=1 // pred_fallthru
      _
    // Predicated region
    $region38: #{tpu_custom_call.1} parent=1 // pred_check
      _
    $region39: #{tpu_custom_call.1} parent=1 // pred_check_branch
      %69 = sbr.rel (0) target = $region41
    $region40: #{tpu_custom_call.1} parent=1 // pred_region
      %71 = dma.done [#allocation7], 6144
    $region41: #{tpu_custom_call.1} parent=1 // pred_fallthru
      _
    %v73 = vld [vmem:[%s0] sm:$0xff]
    %v74 = vlaneseq
    %v75 = vand.u32 %v74, 127
    %76 = vset.pattern.permute.xlu0 0
    %77 = vperm.xlu0 %76, %v73
    %v78 = vpop.permute.xlu0 %77
    %vm79 = vcmp.eq.s32.totalorder %v75, %v78
    %v80 = vsel %vm79, 1, 0
    %v81 = vcvt.s32.f32 %v80
    %v82 = vpack.c.bf16 %v81, %v81
    %v83 = vld [vmem:[%s1] sm:$0xf]
    %v84 = vld [vmem:[%s1 + $0x4] sm:$0xf]
    %v87 = vunpack.c.l.b16 %v83
    %v88 = vunpack.c.l.b16 %v84
    %v89 = vpack.c.b16 %v88, %v87
    %vm91 = vcmask 130048
    %v93 = vsel %vm91, %v82, 0
    %95 = vmatpush.bf16.msra.mxu0 0
    %96 = vmatpush.bf16.msra.mxu0 0
    %97 = vmatpush.bf16.msra.mxu0 0
    %98 = vmatpush.bf16.msra.mxu0 0
    %99 = vmatpush.bf16.msra.mxu0 0
    %100 = vmatpush.bf16.msra.mxu0 0
    %101 = vmatpush.bf16.msra.mxu0 0
    %102 = vmatpush.bf16.msra.mxu0 %v89
    %103 = vmatmul.bf16.gmra.mxu0 %v93
    %v104 = vpop.f32.mrf.mxu0
    %v105 = vadd.f32 0.0, %v104
    %v106 = vpop.f32.mrf.mxu0
    %107 = vdwg.mxu0
    %v108 = vpack.c.bf16 %v105, %v105
    %v109 = vld [vmem:[#allocation6] sm:$0xff]
    %v110 = vld [vmem:[#allocation6 + $0x8] sm:$0xf]
    %v111 = vld [vmem:[#allocation6 + $0xc] sm:$0xff]
    %v112 = vld [vmem:[#allocation6 + $0x14] sm:$0xf]
    %v113 = vld [vmem:[#allocation6 + $0x18] sm:$0xff]
    %v114 = vld [vmem:[#allocation6 + $0x20] sm:$0xf]
    %v115 = vld [vmem:[#allocation6 + $0x24] sm:$0xff]
    %v116 = vld [vmem:[#allocation6 + $0x2c] sm:$0xf]
    %v117 = vld [vmem:[#allocation6 + $0x30] sm:$0xff]
    %v118 = vld [vmem:[#allocation6 + $0x38] sm:$0xf]
    %v119 = vld [vmem:[#allocation6 + $0x3c] sm:$0xff]
    %v120 = vld [vmem:[#allocation6 + $0x44] sm:$0xf]
    %v121 = vld [vmem:[#allocation6 + $0x48] sm:$0xff]
    %v122 = vld [vmem:[#allocation6 + $0x50] sm:$0xf]
    %v123 = vld [vmem:[#allocation6 + $0x54] sm:$0xff]
    %v124 = vld [vmem:[#allocation6 + $0x5c] sm:$0xf]
    %v125 = vld [vmem:[#allocation6 + $0x60] sm:$0xff]
    %v126 = vld [vmem:[#allocation6 + $0x68] sm:$0xf]
    %v127 = vld [vmem:[#allocation6 + $0x6c] sm:$0xff]
    %v128 = vld [vmem:[#allocation6 + $0x74] sm:$0xf]
    %v129 = vld [vmem:[#allocation6 + $0x78] sm:$0xff]
    %v130 = vld [vmem:[#allocation6 + $0x80] sm:$0xf]
    %v131 = vld [vmem:[#allocation6 + $0x84] sm:$0xff]
    %v132 = vld [vmem:[#allocation6 + $0x8c] sm:$0xf]
    %v133 = vld [vmem:[#allocation6 + $0x90] sm:$0xff]
    %v134 = vld [vmem:[#allocation6 + $0x98] sm:$0xf]
    %v135 = vld [vmem:[#allocation6 + $0x9c] sm:$0xff]
    %v136 = vld [vmem:[#allocation6 + $0xa4] sm:$0xf]
    %v137 = vld [vmem:[#allocation6 + $0xa8] sm:$0xff]
    %v138 = vld [vmem:[#allocation6 + $0xb0] sm:$0xf]
    %v139 = vld [vmem:[#allocation6 + $0xb4] sm:$0xff]
    %v140 = vld [vmem:[#allocation6 + $0xbc] sm:$0xf]
    %v141 = vld [vmem:[%s5] sm:$0x7]
    %v143 = vperm.slane %v141, 0
    %v144 = vperm.slane %v141, 1
    %v145 = vperm.slane %v141, 2
    %v181 = vunpack.c.l.b16 %v109
    %v182 = vunpack.c.h.b16 %v109
    %v183 = vunpack.c.l.b16 %v110
    %v184 = vunpack.c.l.b16 %v111
    %v185 = vunpack.c.h.b16 %v111
    %v186 = vunpack.c.l.b16 %v112
    %v187 = vunpack.c.l.b16 %v113
    %v188 = vunpack.c.h.b16 %v113
    %v189 = vunpack.c.l.b16 %v114
    %v190 = vunpack.c.l.b16 %v115
    %v191 = vunpack.c.h.b16 %v115
    %v192 = vunpack.c.l.b16 %v116
    %v193 = vunpack.c.l.b16 %v117
    %v194 = vunpack.c.h.b16 %v117
    %v195 = vunpack.c.l.b16 %v118
    %v196 = vunpack.c.l.b16 %v119
    %v197 = vunpack.c.h.b16 %v119
    %v198 = vunpack.c.l.b16 %v120
    %v199 = vunpack.c.l.b16 %v121
    %v200 = vunpack.c.h.b16 %v121
    %v201 = vunpack.c.l.b16 %v122
    %v202 = vunpack.c.l.b16 %v123
    %v203 = vunpack.c.h.b16 %v123
    %v204 = vunpack.c.l.b16 %v124
    %v205 = vunpack.c.l.b16 %v125
    %v206 = vunpack.c.h.b16 %v125
    %v207 = vunpack.c.l.b16 %v126
    %v208 = vunpack.c.l.b16 %v127
    %v209 = vunpack.c.h.b16 %v127
    %v210 = vunpack.c.l.b16 %v128
    %v211 = vunpack.c.l.b16 %v129
    %v212 = vunpack.c.h.b16 %v129
    %v213 = vunpack.c.l.b16 %v130
    %v214 = vunpack.c.l.b16 %v131
    %v215 = vunpack.c.h.b16 %v131
    %v216 = vunpack.c.l.b16 %v132
    %v217 = vunpack.c.l.b16 %v133
    %v218 = vunpack.c.h.b16 %v133
    %v219 = vunpack.c.l.b16 %v134
    %v220 = vunpack.c.l.b16 %v135
    %v221 = vunpack.c.h.b16 %v135
    %v222 = vunpack.c.l.b16 %v136
    %v223 = vunpack.c.l.b16 %v137
    %v224 = vunpack.c.h.b16 %v137
    %v225 = vunpack.c.l.b16 %v138
    %v226 = vunpack.c.l.b16 %v139
    %v227 = vunpack.c.h.b16 %v139
    %v228 = vunpack.c.l.b16 %v140
    %v229 = vpack.c.b16 %v184, %v181
    %v230 = vpack.c.b16 %v185, %v182
    %v231 = vpack.c.b16 %v186, %v183
    %v232 = vpack.c.b16 %v190, %v187
    %v233 = vpack.c.b16 %v191, %v188
    %v234 = vpack.c.b16 %v192, %v189
    %v235 = vpack.c.b16 %v196, %v193
    %v236 = vpack.c.b16 %v197, %v194
    %v237 = vpack.c.b16 %v198, %v195
    %v238 = vpack.c.b16 %v202, %v199
    %v239 = vpack.c.b16 %v203, %v200
    %v240 = vpack.c.b16 %v204, %v201
    %v241 = vpack.c.b16 %v208, %v205
    %v242 = vpack.c.b16 %v209, %v206
    %v243 = vpack.c.b16 %v210, %v207
    %v244 = vpack.c.b16 %v214, %v211
    %v245 = vpack.c.b16 %v215, %v212
    %v246 = vpack.c.b16 %v216, %v213
    %v247 = vpack.c.b16 %v220, %v217
    %v248 = vpack.c.b16 %v221, %v218
    %v249 = vpack.c.b16 %v222, %v219
    %v250 = vpack.c.b16 %v226, %v223
    %v251 = vpack.c.b16 %v227, %v224
    %v252 = vpack.c.b16 %v228, %v225
    %277 = vmatpush.bf16.msra.mxu0 %v250
    %278 = vmatpush.bf16.msra.mxu0 %v247
    %279 = vmatpush.bf16.msra.mxu0 %v244
    %280 = vmatpush.bf16.msra.mxu0 %v241
    %281 = vmatpush.bf16.msra.mxu0 %v238
    %282 = vmatpush.bf16.msra.mxu0 %v235
    %283 = vmatpush.bf16.msra.mxu0 %v232
    %284 = vmatpush.bf16.msra.mxu0 %v229
    %285 = vmatmul.bf16.gmra.mxu0 %v108
    %v286 = vpop.f32.mrf.mxu0
    %v287 = vadd.f32 %v143, %v286
    %v288 = vpop.f32.mrf.mxu0
    %289 = vdwg.mxu0
    %290 = vmatpush.bf16.msra.mxu0 %v251
    %291 = vmatpush.bf16.msra.mxu0 %v248
    %292 = vmatpush.bf16.msra.mxu0 %v245
    %293 = vmatpush.bf16.msra.mxu0 %v242
    %294 = vmatpush.bf16.msra.mxu0 %v239
    %295 = vmatpush.bf16.msra.mxu0 %v236
    %296 = vmatpush.bf16.msra.mxu0 %v233
    %297 = vmatpush.bf16.msra.mxu0 %v230
    %298 = vmatmul.bf16.gmra.mxu0 %v108
    %v299 = vpop.f32.mrf.mxu0
    %v300 = vadd.f32 %v144, %v299
    %v301 = vpop.f32.mrf.mxu0
    %302 = vdwg.mxu0
    %303 = vmatpush.bf16.msra.mxu0 %v252
    %304 = vmatpush.bf16.msra.mxu0 %v249
    %305 = vmatpush.bf16.msra.mxu0 %v246
    %306 = vmatpush.bf16.msra.mxu0 %v243
    %307 = vmatpush.bf16.msra.mxu0 %v240
    %308 = vmatpush.bf16.msra.mxu0 %v237
    %309 = vmatpush.bf16.msra.mxu0 %v234
    %310 = vmatpush.bf16.msra.mxu0 %v231
    %311 = vmatmul.bf16.gmra.mxu0 %v108
    %v312 = vpop.f32.mrf.mxu0
    %v313 = vadd.f32 %v145, %v312
    %v314 = vpop.f32.mrf.mxu0
    %315 = vdwg.mxu0
    %316 = vst [vmem:[#allocation2] sm:$0xff] %v287
    %317 = vst [vmem:[#allocation2 + $0x8] sm:$0xff] %v300
    %318 = vst [vmem:[#allocation2 + $0x10] sm:$0xff] %v313
    %v319 = vld [vmem:[#allocation8] sm:$0xff]
    %v320 = vld [vmem:[#allocation8 + $0x8] sm:$0xff]
    %v321 = vld [vmem:[#allocation8 + $0x10] sm:$0xff]
    %v322 = vld [vmem:[#allocation8 + $0x18] sm:$0xff]
    %v323 = vld [vmem:[#allocation8 + $0x20] sm:$0xff]
    %v324 = vld [vmem:[#allocation8 + $0x28] sm:$0xff]
    %v325 = vld [vmem:[#allocation8 + $0x30] sm:$0xff]
    %v326 = vld [vmem:[#allocation8 + $0x38] sm:$0xff]
    %v327 = vld [vmem:[#allocation8 + $0x40] sm:$0xff]
    %v328 = vld [vmem:[#allocation8 + $0x48] sm:$0xff]
    %v329 = vld [vmem:[#allocation8 + $0x50] sm:$0xff]
    %v330 = vld [vmem:[#allocation8 + $0x58] sm:$0xff]
    %v331 = vld [vmem:[#allocation8 + $0x60] sm:$0xff]
    %v332 = vld [vmem:[#allocation8 + $0x68] sm:$0xff]
    %v333 = vld [vmem:[#allocation8 + $0x70] sm:$0xff]
    %v334 = vld [vmem:[#allocation8 + $0x78] sm:$0xff]
    %v335 = vld [vmem:[#allocation8 + $0x80] sm:$0xff]
    %v336 = vld [vmem:[#allocation8 + $0x88] sm:$0xff]
    %v337 = vld [vmem:[#allocation8 + $0x90] sm:$0xff]
    %v338 = vld [vmem:[#allocation8 + $0x98] sm:$0xff]
    %v339 = vld [vmem:[#allocation8 + $0xa0] sm:$0xff]
    %v340 = vld [vmem:[#allocation8 + $0xa8] sm:$0xff]
    %v341 = vld [vmem:[#allocation8 + $0xb0] sm:$0xff]
    %v342 = vld [vmem:[#allocation8 + $0xb8] sm:$0xff]
    %v343 = vld [vmem:[#allocation8 + $0xc0] sm:$0xff]
    %v344 = vld [vmem:[#allocation8 + $0xc8] sm:$0xff]
    %v345 = vld [vmem:[#allocation8 + $0xd0] sm:$0xff]
    %v346 = vld [vmem:[#allocation8 + $0xd8] sm:$0xff]
    %v347 = vld [vmem:[#allocation8 + $0xe0] sm:$0xff]
    %v348 = vld [vmem:[#allocation8 + $0xe8] sm:$0xff]
    %v349 = vld [vmem:[#allocation8 + $0xf0] sm:$0xff]
    %v350 = vld [vmem:[#allocation8 + $0xf8] sm:$0xff]
    %v351 = vld [vmem:[#allocation8 + $0x100] sm:$0xff]
    %v352 = vld [vmem:[#allocation8 + $0x108] sm:$0xff]
    %v353 = vld [vmem:[#allocation8 + $0x110] sm:$0xff]
    %v354 = vld [vmem:[#allocation8 + $0x118] sm:$0xff]
    %v355 = vld [vmem:[#allocation8 + $0x120] sm:$0xff]
    %v356 = vld [vmem:[#allocation8 + $0x128] sm:$0xff]
    %v357 = vld [vmem:[#allocation8 + $0x130] sm:$0xff]
    %v358 = vld [vmem:[#allocation8 + $0x138] sm:$0xff]
    %v359 = vld [vmem:[#allocation8 + $0x140] sm:$0xff]
    %v360 = vld [vmem:[#allocation8 + $0x148] sm:$0xff]
    %v361 = vld [vmem:[#allocation8 + $0x150] sm:$0xff]
    %v362 = vld [vmem:[#allocation8 + $0x158] sm:$0xff]
    %v363 = vld [vmem:[#allocation8 + $0x160] sm:$0xff]
    %v364 = vld [vmem:[#allocation8 + $0x168] sm:$0xff]
    %v365 = vld [vmem:[#allocation8 + $0x170] sm:$0xff]
    %v366 = vld [vmem:[#allocation8 + $0x178] sm:$0xff]
    %v367 = vld [vmem:[%s6] sm:$0x1]
    %368 = vst [vmem:[#allocation9] sm:$0xff] 0.0
    %v369 = vld [vmem:[#allocation3] sm:$0x1]
    %v370 = vld [vmem:[#allocation2] ss:$8 sm:$0x7]
    %371 = vmatpush.msra.mxu0 %v364
    %372 = vmatpush.msra.mxu0 %v361
    %373 = vmatpush.msra.mxu0 %v358
    %374 = vmatpush.msra.mxu0 %v355
    %375 = vmatpush.msra.mxu0 %v352
    %376 = vmatpush.msra.mxu0 %v349
    %377 = vmatpush.msra.mxu0 %v346
    %378 = vmatpush.msra.mxu0 %v343
    %379 = vmatpush.msra.mxu0 %v340
    %380 = vmatpush.msra.mxu0 %v337
    %381 = vmatpush.msra.mxu0 %v334
    %382 = vmatpush.msra.mxu0 %v331
    %383 = vmatpush.msra.mxu0 %v328
    %384 = vmatpush.msra.mxu0 %v325
    %385 = vmatpush.msra.mxu0 %v322
    %386 = vmatpush.msra.mxu0 %v319
    %387 = vmatmul.f32.gmra.mxu0 %v369
    %v388 = vpop.f32.mrf.mxu0
    %v389 = vadd.f32 0.0, %v388
    %390 = vdwg.mxu0
    %391 = vmatpush.msra.mxu0 %v365
    %392 = vmatpush.msra.mxu0 %v362
    %393 = vmatpush.msra.mxu0 %v359
    %394 = vmatpush.msra.mxu0 %v356
    %395 = vmatpush.msra.mxu0 %v353
    %396 = vmatpush.msra.mxu0 %v350
    %397 = vmatpush.msra.mxu0 %v347
    %398 = vmatpush.msra.mxu0 %v344
    %399 = vmatpush.msra.mxu0 %v341
    %400 = vmatpush.msra.mxu0 %v338
    %401 = vmatpush.msra.mxu0 %v335
    %402 = vmatpush.msra.mxu0 %v332
    %403 = vmatpush.msra.mxu0 %v329
    %404 = vmatpush.msra.mxu0 %v326
    %405 = vmatpush.msra.mxu0 %v323
    %406 = vmatpush.msra.mxu0 %v320
    %407 = vmatmul.f32.gmra.mxu0 %v369
    %v408 = vpop.f32.mrf.mxu0
    %v409 = vadd.f32 0.0, %v408
    %410 = vdwg.mxu0
    %411 = vmatpush.msra.mxu0 %v366
    %412 = vmatpush.msra.mxu0 %v363
    %413 = vmatpush.msra.mxu0 %v360
    %414 = vmatpush.msra.mxu0 %v357
    %415 = vmatpush.msra.mxu0 %v354
    %416 = vmatpush.msra.mxu0 %v351
    %417 = vmatpush.msra.mxu0 %v348
    %418 = vmatpush.msra.mxu0 %v345
    %419 = vmatpush.msra.mxu0 %v342
    %420 = vmatpush.msra.mxu0 %v339
    %421 = vmatpush.msra.mxu0 %v336
    %422 = vmatpush.msra.mxu0 %v333
    %423 = vmatpush.msra.mxu0 %v330
    %424 = vmatpush.msra.mxu0 %v327
    %425 = vmatpush.msra.mxu0 %v324
    %426 = vmatpush.msra.mxu0 %v321
    %427 = vmatmul.f32.gmra.mxu0 %v369
    %v428 = vpop.f32.mrf.mxu0
    %v429 = vadd.f32 0.0, %v428
    %430 = vdwg.mxu0
    %v431 = vadd.f32 %v370, %v389
    %v432 = vxor.u32 %v431, 2147483648
    %v433 = vmul.f32 %v432, 1.442695
    %v434 = vpow.pop %v433
    %v435 = vadd.f32 %v434, 1.0
    %v436 = vrcp.pop %v435
    %v437 = vmul.f32 %v435, %v436
    %v438 = vsub.f32 1.0, %v437
    %v439 = vmul.f32 %v436, %v438
    %v440 = vadd.f32 %v436, %v439
    %vm441 = vweird.f32 %v435
    %vm442 = vweird.f32 %v436
    %vm443 = vmor %vm441, %vm442
    %v444 = vsel %vm443, %v436, %v440
    %v445 = vand.u32 2147483647, %v435
    %vm446 = vcmp.eq.f32.partialorder %v445, 8.507059e+37
    %v447 = vand.u32 %v435, 2147483648
    %v448 = vor.u32 1.1754944e-38, %v447
    %v449 = vsel %vm446, %v448, %v444
    %v450 = vmul.f32 1.0, %v449
    %v452 = vrot.slane %v370, 1
    %v454 = vadd.f32 %v452, %v409
    %v455 = vxor.u32 %v454, 2147483648
    %v456 = vmul.f32 %v455, 1.442695
    %v457 = vpow.pop %v456
    %v458 = vadd.f32 %v457, 1.0
    %v459 = vrcp.pop %v458
    %v460 = vmul.f32 %v458, %v459
    %v461 = vsub.f32 1.0, %v460
    %v462 = vmul.f32 %v459, %v461
    %v463 = vadd.f32 %v459, %v462
    %vm464 = vweird.f32 %v458
    %vm465 = vweird.f32 %v459
    %vm466 = vmor %vm464, %vm465
    %v467 = vsel %vm466, %v459, %v463
    %v468 = vand.u32 2147483647, %v458
    %vm469 = vcmp.eq.f32.partialorder %v468, 8.507059e+37
    %v470 = vand.u32 %v458, 2147483648
    %v471 = vor.u32 1.1754944e-38, %v470
    %v472 = vsel %vm469, %v471, %v467
    %v473 = vmul.f32 1.0, %v472
    %v474 = vadd.f32 %v429, %v367
    %v475 = vmul.f32 %v450, %v474
    %v476 = vrot.slane %v370, 2
    %v478 = vadd.f32 %v476, %v475
    %v479 = vtanh.pop %v478
    %v480 = vsub.f32 1.0, %v473
    %v481 = vmul.f32 %v480, %v479
    %v482 = vmul.f32 %v473, %v369
    %v483 = vadd.f32 %v481, %v482
    %484 = vst [vmem:[#allocation9] sm:$0x1] %v483
    %s485 = scalar_lea.vmem [#allocation2], 1
    %v486 = vld [vmem:[%s485] ss:$8 sm:$0x7]
    %487 = vmatpush.msra.mxu0 %v364
    %488 = vmatpush.msra.mxu0 %v361
    %489 = vmatpush.msra.mxu0 %v358
    %490 = vmatpush.msra.mxu0 %v355
    %491 = vmatpush.msra.mxu0 %v352
    %492 = vmatpush.msra.mxu0 %v349
    %493 = vmatpush.msra.mxu0 %v346
    %494 = vmatpush.msra.mxu0 %v343
    %495 = vmatpush.msra.mxu0 %v340
    %496 = vmatpush.msra.mxu0 %v337
    %497 = vmatpush.msra.mxu0 %v334
    %498 = vmatpush.msra.mxu0 %v331
    %499 = vmatpush.msra.mxu0 %v328
    %500 = vmatpush.msra.mxu0 %v325
    %501 = vmatpush.msra.mxu0 %v322
    %502 = vmatpush.msra.mxu0 %v319
    %503 = vmatmul.f32.gmra.mxu0 %v483
    %v504 = vpop.f32.mrf.mxu0
    %v505 = vadd.f32 0.0, %v504
    %506 = vdwg.mxu0
    %507 = vmatpush.msra.mxu0 %v365
    %508 = vmatpush.msra.mxu0 %v362
    %509 = vmatpush.msra.mxu0 %v359
    %510 = vmatpush.msra.mxu0 %v356
    %511 = vmatpush.msra.mxu0 %v353
    %512 = vmatpush.msra.mxu0 %v350
    %513 = vmatpush.msra.mxu0 %v347
    %514 = vmatpush.msra.mxu0 %v344
    %515 = vmatpush.msra.mxu0 %v341
    %516 = vmatpush.msra.mxu0 %v338
    %517 = vmatpush.msra.mxu0 %v335
    %518 = vmatpush.msra.mxu0 %v332
    %519 = vmatpush.msra.mxu0 %v329
    %520 = vmatpush.msra.mxu0 %v326
    %521 = vmatpush.msra.mxu0 %v323
    %522 = vmatpush.msra.mxu0 %v320
    %523 = vmatmul.f32.gmra.mxu0 %v483
    %v524 = vpop.f32.mrf.mxu0
    %v525 = vadd.f32 0.0, %v524
    %526 = vdwg.mxu0
    %527 = vmatpush.msra.mxu0 %v366
    %528 = vmatpush.msra.mxu0 %v363
    %529 = vmatpush.msra.mxu0 %v360
    %530 = vmatpush.msra.mxu0 %v357
    %531 = vmatpush.msra.mxu0 %v354
    %532 = vmatpush.msra.mxu0 %v351
    %533 = vmatpush.msra.mxu0 %v348
    %534 = vmatpush.msra.mxu0 %v345
    %535 = vmatpush.msra.mxu0 %v342
    %536 = vmatpush.msra.mxu0 %v339
    %537 = vmatpush.msra.mxu0 %v336
    %538 = vmatpush.msra.mxu0 %v333
    %539 = vmatpush.msra.mxu0 %v330
    %540 = vmatpush.msra.mxu0 %v327
    %541 = vmatpush.msra.mxu0 %v324
    %542 = vmatpush.msra.mxu0 %v321
    %543 = vmatmul.f32.gmra.mxu0 %v483
    %v544 = vpop.f32.mrf.mxu0
    %v545 = vadd.f32 0.0, %v544
    %546 = vdwg.mxu0
    %v547 = vadd.f32 %v486, %v505
    %v548 = vxor.u32 %v547, 2147483648
    %v549 = vmul.f32 %v548, 1.442695
    %v550 = vpow.pop %v549
    %v551 = vadd.f32 %v550, 1.0
    %v552 = vrcp.pop %v551
    %v553 = vmul.f32 %v551, %v552
    %v554 = vsub.f32 1.0, %v553
    %v555 = vmul.f32 %v552, %v554
    %v556 = vadd.f32 %v552, %v555
    %vm557 = vweird.f32 %v551
    %vm558 = vweird.f32 %v552
    %vm559 = vmor %vm557, %vm558
    %v560 = vsel %vm559, %v552, %v556
    %v561 = vand.u32 2147483647, %v551
    %vm562 = vcmp.eq.f32.partialorder %v561, 8.507059e+37
    %v563 = vand.u32 %v551, 2147483648
    %v564 = vor.u32 1.1754944e-38, %v563
    %v565 = vsel %vm562, %v564, %v560
    %v566 = vmul.f32 1.0, %v565
    %v568 = vrot.slane %v486, 1
    %v570 = vadd.f32 %v568, %v525
    %v571 = vxor.u32 %v570, 2147483648
    %v572 = vmul.f32 %v571, 1.442695
    %v573 = vpow.pop %v572
    %v574 = vadd.f32 %v573, 1.0
    %v575 = vrcp.pop %v574
    %v576 = vmul.f32 %v574, %v575
    %v577 = vsub.f32 1.0, %v576
    %v578 = vmul.f32 %v575, %v577
    %v579 = vadd.f32 %v575, %v578
    %vm580 = vweird.f32 %v574
    %vm581 = vweird.f32 %v575
    %vm582 = vmor %vm580, %vm581
    %v583 = vsel %vm582, %v575, %v579
    %v584 = vand.u32 2147483647, %v574
    %vm585 = vcmp.eq.f32.partialorder %v584, 8.507059e+37
    %v586 = vand.u32 %v574, 2147483648
    %v587 = vor.u32 1.1754944e-38, %v586
    %v588 = vsel %vm585, %v587, %v583
    %v589 = vmul.f32 1.0, %v588
    %v590 = vadd.f32 %v545, %v367
    %v591 = vmul.f32 %v566, %v590
    %v592 = vrot.slane %v486, 2
    %v594 = vadd.f32 %v592, %v591
    %v595 = vtanh.pop %v594
    %v596 = vsub.f32 1.0, %v589
    %v597 = vmul.f32 %v596, %v595
    %v598 = vmul.f32 %v589, %v483
    %v599 = vadd.f32 %v597, %v598
    %600 = vst [vmem:[#allocation9 + $0x1] sm:$0x1] %v599
    %s601 = scalar_lea.vmem [#allocation2], 2
    %v602 = vld [vmem:[%s601] ss:$8 sm:$0x7]
    %603 = vmatpush.msra.mxu0 %v364
    %604 = vmatpush.msra.mxu0 %v361
    %605 = vmatpush.msra.mxu0 %v358
    %606 = vmatpush.msra.mxu0 %v355
    %607 = vmatpush.msra.mxu0 %v352
    %608 = vmatpush.msra.mxu0 %v349
    %609 = vmatpush.msra.mxu0 %v346
    %610 = vmatpush.msra.mxu0 %v343
    %611 = vmatpush.msra.mxu0 %v340
    %612 = vmatpush.msra.mxu0 %v337
    %613 = vmatpush.msra.mxu0 %v334
    %614 = vmatpush.msra.mxu0 %v331
    %615 = vmatpush.msra.mxu0 %v328
    %616 = vmatpush.msra.mxu0 %v325
    %617 = vmatpush.msra.mxu0 %v322
    %618 = vmatpush.msra.mxu0 %v319
    %619 = vmatmul.f32.gmra.mxu0 %v599
    %v620 = vpop.f32.mrf.mxu0
    %v621 = vadd.f32 0.0, %v620
    %622 = vdwg.mxu0
    %623 = vmatpush.msra.mxu0 %v365
    %624 = vmatpush.msra.mxu0 %v362
    %625 = vmatpush.msra.mxu0 %v359
    %626 = vmatpush.msra.mxu0 %v356
    %627 = vmatpush.msra.mxu0 %v353
    %628 = vmatpush.msra.mxu0 %v350
    %629 = vmatpush.msra.mxu0 %v347
    %630 = vmatpush.msra.mxu0 %v344
    %631 = vmatpush.msra.mxu0 %v341
    %632 = vmatpush.msra.mxu0 %v338
    %633 = vmatpush.msra.mxu0 %v335
    %634 = vmatpush.msra.mxu0 %v332
    %635 = vmatpush.msra.mxu0 %v329
    %636 = vmatpush.msra.mxu0 %v326
    %637 = vmatpush.msra.mxu0 %v323
    %638 = vmatpush.msra.mxu0 %v320
    %639 = vmatmul.f32.gmra.mxu0 %v599
    %v640 = vpop.f32.mrf.mxu0
    %v641 = vadd.f32 0.0, %v640
    %642 = vdwg.mxu0
    %643 = vmatpush.msra.mxu0 %v366
    %644 = vmatpush.msra.mxu0 %v363
    %645 = vmatpush.msra.mxu0 %v360
    %646 = vmatpush.msra.mxu0 %v357
    %647 = vmatpush.msra.mxu0 %v354
    %648 = vmatpush.msra.mxu0 %v351
    %649 = vmatpush.msra.mxu0 %v348
    %650 = vmatpush.msra.mxu0 %v345
    %651 = vmatpush.msra.mxu0 %v342
    %652 = vmatpush.msra.mxu0 %v339
    %653 = vmatpush.msra.mxu0 %v336
    %654 = vmatpush.msra.mxu0 %v333
    %655 = vmatpush.msra.mxu0 %v330
    %656 = vmatpush.msra.mxu0 %v327
    %657 = vmatpush.msra.mxu0 %v324
    %658 = vmatpush.msra.mxu0 %v321
    %659 = vmatmul.f32.gmra.mxu0 %v599
    %v660 = vpop.f32.mrf.mxu0
    %v661 = vadd.f32 0.0, %v660
    %662 = vdwg.mxu0
    %v663 = vadd.f32 %v602, %v621
    %v664 = vxor.u32 %v663, 2147483648
    %v665 = vmul.f32 %v664, 1.442695
    %v666 = vpow.pop %v665
    %v667 = vadd.f32 %v666, 1.0
    %v668 = vrcp.pop %v667
    %v669 = vmul.f32 %v667, %v668
    %v670 = vsub.f32 1.0, %v669
    %v671 = vmul.f32 %v668, %v670
    %v672 = vadd.f32 %v668, %v671
    %vm673 = vweird.f32 %v667
    %vm674 = vweird.f32 %v668
    %vm675 = vmor %vm673, %vm674
    %v676 = vsel %vm675, %v668, %v672
    %v677 = vand.u32 2147483647, %v667
    %vm678 = vcmp.eq.f32.partialorder %v677, 8.507059e+37
    %v679 = vand.u32 %v667, 2147483648
    %v680 = vor.u32 1.1754944e-38, %v679
    %v681 = vsel %vm678, %v680, %v676
    %v682 = vmul.f32 1.0, %v681
    %v684 = vrot.slane %v602, 1
    %v686 = vadd.f32 %v684, %v641
    %v687 = vxor.u32 %v686, 2147483648
    %v688 = vmul.f32 %v687, 1.442695
    %v689 = vpow.pop %v688
    %v690 = vadd.f32 %v689, 1.0
    %v691 = vrcp.pop %v690
    %v692 = vmul.f32 %v690, %v691
    %v693 = vsub.f32 1.0, %v692
    %v694 = vmul.f32 %v691, %v693
    %v695 = vadd.f32 %v691, %v694
    %vm696 = vweird.f32 %v690
    %vm697 = vweird.f32 %v691
    %vm698 = vmor %vm696, %vm697
    %v699 = vsel %vm698, %v691, %v695
    %v700 = vand.u32 2147483647, %v690
    %vm701 = vcmp.eq.f32.partialorder %v700, 8.507059e+37
    %v702 = vand.u32 %v690, 2147483648
    %v703 = vor.u32 1.1754944e-38, %v702
    %v704 = vsel %vm701, %v703, %v699
    %v705 = vmul.f32 1.0, %v704
    %v706 = vadd.f32 %v661, %v367
    %v707 = vmul.f32 %v682, %v706
    %v708 = vrot.slane %v602, 2
    %v710 = vadd.f32 %v708, %v707
    %v711 = vtanh.pop %v710
    %v712 = vsub.f32 1.0, %v705
    %v713 = vmul.f32 %v712, %v711
    %v714 = vmul.f32 %v705, %v599
    %v715 = vadd.f32 %v713, %v714
    %716 = vst [vmem:[#allocation9 + $0x2] sm:$0x1] %v715
    %s717 = scalar_lea.vmem [#allocation2], 3
    %v718 = vld [vmem:[%s717] ss:$8 sm:$0x7]
    %719 = vmatpush.msra.mxu0 %v364
    %720 = vmatpush.msra.mxu0 %v361
    %721 = vmatpush.msra.mxu0 %v358
    %722 = vmatpush.msra.mxu0 %v355
    %723 = vmatpush.msra.mxu0 %v352
    %724 = vmatpush.msra.mxu0 %v349
    %725 = vmatpush.msra.mxu0 %v346
    %726 = vmatpush.msra.mxu0 %v343
    %727 = vmatpush.msra.mxu0 %v340
    %728 = vmatpush.msra.mxu0 %v337
    %729 = vmatpush.msra.mxu0 %v334
    %730 = vmatpush.msra.mxu0 %v331
    %731 = vmatpush.msra.mxu0 %v328
    %732 = vmatpush.msra.mxu0 %v325
    %733 = vmatpush.msra.mxu0 %v322
    %734 = vmatpush.msra.mxu0 %v319
    %735 = vmatmul.f32.gmra.mxu0 %v715
    %v736 = vpop.f32.mrf.mxu0
    %v737 = vadd.f32 0.0, %v736
    %738 = vdwg.mxu0
    %739 = vmatpush.msra.mxu0 %v365
    %740 = vmatpush.msra.mxu0 %v362
    %741 = vmatpush.msra.mxu0 %v359
    %742 = vmatpush.msra.mxu0 %v356
    %743 = vmatpush.msra.mxu0 %v353
    %744 = vmatpush.msra.mxu0 %v350
    %745 = vmatpush.msra.mxu0 %v347
    %746 = vmatpush.msra.mxu0 %v344
    %747 = vmatpush.msra.mxu0 %v341
    %748 = vmatpush.msra.mxu0 %v338
    %749 = vmatpush.msra.mxu0 %v335
    %750 = vmatpush.msra.mxu0 %v332
    %751 = vmatpush.msra.mxu0 %v329
    %752 = vmatpush.msra.mxu0 %v326
    %753 = vmatpush.msra.mxu0 %v323
    %754 = vmatpush.msra.mxu0 %v320
    %755 = vmatmul.f32.gmra.mxu0 %v715
    %v756 = vpop.f32.mrf.mxu0
    %v757 = vadd.f32 0.0, %v756
    %758 = vdwg.mxu0
    %759 = vmatpush.msra.mxu0 %v366
    %760 = vmatpush.msra.mxu0 %v363
    %761 = vmatpush.msra.mxu0 %v360
    %762 = vmatpush.msra.mxu0 %v357
    %763 = vmatpush.msra.mxu0 %v354
    %764 = vmatpush.msra.mxu0 %v351
    %765 = vmatpush.msra.mxu0 %v348
    %766 = vmatpush.msra.mxu0 %v345
    %767 = vmatpush.msra.mxu0 %v342
    %768 = vmatpush.msra.mxu0 %v339
    %769 = vmatpush.msra.mxu0 %v336
    %770 = vmatpush.msra.mxu0 %v333
    %771 = vmatpush.msra.mxu0 %v330
    %772 = vmatpush.msra.mxu0 %v327
    %773 = vmatpush.msra.mxu0 %v324
    %774 = vmatpush.msra.mxu0 %v321
    %775 = vmatmul.f32.gmra.mxu0 %v715
    %v776 = vpop.f32.mrf.mxu0
    %v777 = vadd.f32 0.0, %v776
    %778 = vdwg.mxu0
    %v779 = vadd.f32 %v718, %v737
    %v780 = vxor.u32 %v779, 2147483648
    %v781 = vmul.f32 %v780, 1.442695
    %v782 = vpow.pop %v781
    %v783 = vadd.f32 %v782, 1.0
    %v784 = vrcp.pop %v783
    %v785 = vmul.f32 %v783, %v784
    %v786 = vsub.f32 1.0, %v785
    %v787 = vmul.f32 %v784, %v786
    %v788 = vadd.f32 %v784, %v787
    %vm789 = vweird.f32 %v783
    %vm790 = vweird.f32 %v784
    %vm791 = vmor %vm789, %vm790
    %v792 = vsel %vm791, %v784, %v788
    %v793 = vand.u32 2147483647, %v783
    %vm794 = vcmp.eq.f32.partialorder %v793, 8.507059e+37
    %v795 = vand.u32 %v783, 2147483648
    %v796 = vor.u32 1.1754944e-38, %v795
    %v797 = vsel %vm794, %v796, %v792
    %v798 = vmul.f32 1.0, %v797
    %v800 = vrot.slane %v718, 1
    %v802 = vadd.f32 %v800, %v757
    %v803 = vxor.u32 %v802, 2147483648
    %v804 = vmul.f32 %v803, 1.442695
    %v805 = vpow.pop %v804
    %v806 = vadd.f32 %v805, 1.0
    %v807 = vrcp.pop %v806
    %v808 = vmul.f32 %v806, %v807
    %v809 = vsub.f32 1.0, %v808
    %v810 = vmul.f32 %v807, %v809
    %v811 = vadd.f32 %v807, %v810
    %vm812 = vweird.f32 %v806
    %vm813 = vweird.f32 %v807
    %vm814 = vmor %vm812, %vm813
    %v815 = vsel %vm814, %v807, %v811
    %v816 = vand.u32 2147483647, %v806
    %vm817 = vcmp.eq.f32.partialorder %v816, 8.507059e+37
    %v818 = vand.u32 %v806, 2147483648
    %v819 = vor.u32 1.1754944e-38, %v818
    %v820 = vsel %vm817, %v819, %v815
    %v821 = vmul.f32 1.0, %v820
    %v822 = vadd.f32 %v777, %v367
    %v823 = vmul.f32 %v798, %v822
    %v824 = vrot.slane %v718, 2
    %v826 = vadd.f32 %v824, %v823
    %v827 = vtanh.pop %v826
    %v828 = vsub.f32 1.0, %v821
    %v829 = vmul.f32 %v828, %v827
    %v830 = vmul.f32 %v821, %v715
    %v831 = vadd.f32 %v829, %v830
    %832 = vst [vmem:[#allocation9 + $0x3] sm:$0x1] %v831
    %s833 = scalar_lea.vmem [#allocation2], 4
    %v834 = vld [vmem:[%s833] ss:$8 sm:$0x7]
    %835 = vmatpush.msra.mxu0 %v364
    %836 = vmatpush.msra.mxu0 %v361
    %837 = vmatpush.msra.mxu0 %v358
    %838 = vmatpush.msra.mxu0 %v355
    %839 = vmatpush.msra.mxu0 %v352
    %840 = vmatpush.msra.mxu0 %v349
    %841 = vmatpush.msra.mxu0 %v346
    %842 = vmatpush.msra.mxu0 %v343
    %843 = vmatpush.msra.mxu0 %v340
    %844 = vmatpush.msra.mxu0 %v337
    %845 = vmatpush.msra.mxu0 %v334
    %846 = vmatpush.msra.mxu0 %v331
    %847 = vmatpush.msra.mxu0 %v328
    %848 = vmatpush.msra.mxu0 %v325
    %849 = vmatpush.msra.mxu0 %v322
    %850 = vmatpush.msra.mxu0 %v319
    %851 = vmatmul.f32.gmra.mxu0 %v831
    %v852 = vpop.f32.mrf.mxu0
    %v853 = vadd.f32 0.0, %v852
    %854 = vdwg.mxu0
    %855 = vmatpush.msra.mxu0 %v365
    %856 = vmatpush.msra.mxu0 %v362
    %857 = vmatpush.msra.mxu0 %v359
    %858 = vmatpush.msra.mxu0 %v356
    %859 = vmatpush.msra.mxu0 %v353
    %860 = vmatpush.msra.mxu0 %v350
    %861 = vmatpush.msra.mxu0 %v347
    %862 = vmatpush.msra.mxu0 %v344
    %863 = vmatpush.msra.mxu0 %v341
    %864 = vmatpush.msra.mxu0 %v338
    %865 = vmatpush.msra.mxu0 %v335
    %866 = vmatpush.msra.mxu0 %v332
    %867 = vmatpush.msra.mxu0 %v329
    %868 = vmatpush.msra.mxu0 %v326
    %869 = vmatpush.msra.mxu0 %v323
    %870 = vmatpush.msra.mxu0 %v320
    %871 = vmatmul.f32.gmra.mxu0 %v831
    %v872 = vpop.f32.mrf.mxu0
    %v873 = vadd.f32 0.0, %v872
    %874 = vdwg.mxu0
    %875 = vmatpush.msra.mxu0 %v366
    %876 = vmatpush.msra.mxu0 %v363
    %877 = vmatpush.msra.mxu0 %v360
    %878 = vmatpush.msra.mxu0 %v357
    %879 = vmatpush.msra.mxu0 %v354
    %880 = vmatpush.msra.mxu0 %v351
    %881 = vmatpush.msra.mxu0 %v348
    %882 = vmatpush.msra.mxu0 %v345
    %883 = vmatpush.msra.mxu0 %v342
    %884 = vmatpush.msra.mxu0 %v339
    %885 = vmatpush.msra.mxu0 %v336
    %886 = vmatpush.msra.mxu0 %v333
    %887 = vmatpush.msra.mxu0 %v330
    %888 = vmatpush.msra.mxu0 %v327
    %889 = vmatpush.msra.mxu0 %v324
    %890 = vmatpush.msra.mxu0 %v321
    %891 = vmatmul.f32.gmra.mxu0 %v831
    %v892 = vpop.f32.mrf.mxu0
    %v893 = vadd.f32 0.0, %v892
    %894 = vdwg.mxu0
    %v895 = vadd.f32 %v834, %v853
    %v896 = vxor.u32 %v895, 2147483648
    %v897 = vmul.f32 %v896, 1.442695
    %v898 = vpow.pop %v897
    %v899 = vadd.f32 %v898, 1.0
    %v900 = vrcp.pop %v899
    %v901 = vmul.f32 %v899, %v900
    %v902 = vsub.f32 1.0, %v901
    %v903 = vmul.f32 %v900, %v902
    %v904 = vadd.f32 %v900, %v903
    %vm905 = vweird.f32 %v899
    %vm906 = vweird.f32 %v900
    %vm907 = vmor %vm905, %vm906
    %v908 = vsel %vm907, %v900, %v904
    %v909 = vand.u32 2147483647, %v899
    %vm910 = vcmp.eq.f32.partialorder %v909, 8.507059e+37
    %v911 = vand.u32 %v899, 2147483648
    %v912 = vor.u32 1.1754944e-38, %v911
    %v913 = vsel %vm910, %v912, %v908
    %v914 = vmul.f32 1.0, %v913
    %v916 = vrot.slane %v834, 1
    %v918 = vadd.f32 %v916, %v873
    %v919 = vxor.u32 %v918, 2147483648
    %v920 = vmul.f32 %v919, 1.442695
    %v921 = vpow.pop %v920
    %v922 = vadd.f32 %v921, 1.0
    %v923 = vrcp.pop %v922
    %v924 = vmul.f32 %v922, %v923
    %v925 = vsub.f32 1.0, %v924
    %v926 = vmul.f32 %v923, %v925
    %v927 = vadd.f32 %v923, %v926
    %vm928 = vweird.f32 %v922
    %vm929 = vweird.f32 %v923
    %vm930 = vmor %vm928, %vm929
    %v931 = vsel %vm930, %v923, %v927
    %v932 = vand.u32 2147483647, %v922
    %vm933 = vcmp.eq.f32.partialorder %v932, 8.507059e+37
    %v934 = vand.u32 %v922, 2147483648
    %v935 = vor.u32 1.1754944e-38, %v934
    %v936 = vsel %vm933, %v935, %v931
    %v937 = vmul.f32 1.0, %v936
    %v938 = vadd.f32 %v893, %v367
    %v939 = vmul.f32 %v914, %v938
    %v940 = vrot.slane %v834, 2
    %v942 = vadd.f32 %v940, %v939
    %v943 = vtanh.pop %v942
    %v944 = vsub.f32 1.0, %v937
    %v945 = vmul.f32 %v944, %v943
    %v946 = vmul.f32 %v937, %v831
    %v947 = vadd.f32 %v945, %v946
    %948 = vst [vmem:[#allocation9 + $0x4] sm:$0x1] %v947
    %s949 = scalar_lea.vmem [#allocation2], 5
    %v950 = vld [vmem:[%s949] ss:$8 sm:$0x7]
    %951 = vmatpush.msra.mxu0 %v364
    %952 = vmatpush.msra.mxu0 %v361
    %953 = vmatpush.msra.mxu0 %v358
    %954 = vmatpush.msra.mxu0 %v355
    %955 = vmatpush.msra.mxu0 %v352
    %956 = vmatpush.msra.mxu0 %v349
    %957 = vmatpush.msra.mxu0 %v346
    %958 = vmatpush.msra.mxu0 %v343
    %959 = vmatpush.msra.mxu0 %v340
    %960 = vmatpush.msra.mxu0 %v337
    %961 = vmatpush.msra.mxu0 %v334
    %962 = vmatpush.msra.mxu0 %v331
    %963 = vmatpush.msra.mxu0 %v328
    %964 = vmatpush.msra.mxu0 %v325
    %965 = vmatpush.msra.mxu0 %v322
    %966 = vmatpush.msra.mxu0 %v319
    %967 = vmatmul.f32.gmra.mxu0 %v947
    %v968 = vpop.f32.mrf.mxu0
    %v969 = vadd.f32 0.0, %v968
    %970 = vdwg.mxu0
    %971 = vmatpush.msra.mxu0 %v365
    %972 = vmatpush.msra.mxu0 %v362
    %973 = vmatpush.msra.mxu0 %v359
    %974 = vmatpush.msra.mxu0 %v356
    %975 = vmatpush.msra.mxu0 %v353
    %976 = vmatpush.msra.mxu0 %v350
    %977 = vmatpush.msra.mxu0 %v347
    %978 = vmatpush.msra.mxu0 %v344
    %979 = vmatpush.msra.mxu0 %v341
    %980 = vmatpush.msra.mxu0 %v338
    %981 = vmatpush.msra.mxu0 %v335
    %982 = vmatpush.msra.mxu0 %v332
    %983 = vmatpush.msra.mxu0 %v329
    %984 = vmatpush.msra.mxu0 %v326
    %985 = vmatpush.msra.mxu0 %v323
    %986 = vmatpush.msra.mxu0 %v320
    %987 = vmatmul.f32.gmra.mxu0 %v947
    %v988 = vpop.f32.mrf.mxu0
    %v989 = vadd.f32 0.0, %v988
    %990 = vdwg.mxu0
    %991 = vmatpush.msra.mxu0 %v366
    %992 = vmatpush.msra.mxu0 %v363
    %993 = vmatpush.msra.mxu0 %v360
    %994 = vmatpush.msra.mxu0 %v357
    %995 = vmatpush.msra.mxu0 %v354
    %996 = vmatpush.msra.mxu0 %v351
    %997 = vmatpush.msra.mxu0 %v348
    %998 = vmatpush.msra.mxu0 %v345
    %999 = vmatpush.msra.mxu0 %v342
    %1000 = vmatpush.msra.mxu0 %v339
    %1001 = vmatpush.msra.mxu0 %v336
    %1002 = vmatpush.msra.mxu0 %v333
    %1003 = vmatpush.msra.mxu0 %v330
    %1004 = vmatpush.msra.mxu0 %v327
    %1005 = vmatpush.msra.mxu0 %v324
    %1006 = vmatpush.msra.mxu0 %v321
    %1007 = vmatmul.f32.gmra.mxu0 %v947
    %v1008 = vpop.f32.mrf.mxu0
    %v1009 = vadd.f32 0.0, %v1008
    %1010 = vdwg.mxu0
    %v1011 = vadd.f32 %v950, %v969
    %v1012 = vxor.u32 %v1011, 2147483648
    %v1013 = vmul.f32 %v1012, 1.442695
    %v1014 = vpow.pop %v1013
    %v1015 = vadd.f32 %v1014, 1.0
    %v1016 = vrcp.pop %v1015
    %v1017 = vmul.f32 %v1015, %v1016
    %v1018 = vsub.f32 1.0, %v1017
    %v1019 = vmul.f32 %v1016, %v1018
    %v1020 = vadd.f32 %v1016, %v1019
    %vm1021 = vweird.f32 %v1015
    %vm1022 = vweird.f32 %v1016
    %vm1023 = vmor %vm1021, %vm1022
    %v1024 = vsel %vm1023, %v1016, %v1020
    %v1025 = vand.u32 2147483647, %v1015
    %vm1026 = vcmp.eq.f32.partialorder %v1025, 8.507059e+37
    %v1027 = vand.u32 %v1015, 2147483648
    %v1028 = vor.u32 1.1754944e-38, %v1027
    %v1029 = vsel %vm1026, %v1028, %v1024
    %v1030 = vmul.f32 1.0, %v1029
    %v1032 = vrot.slane %v950, 1
    %v1034 = vadd.f32 %v1032, %v989
    %v1035 = vxor.u32 %v1034, 2147483648
    %v1036 = vmul.f32 %v1035, 1.442695
    %v1037 = vpow.pop %v1036
    %v1038 = vadd.f32 %v1037, 1.0
    %v1039 = vrcp.pop %v1038
    %v1040 = vmul.f32 %v1038, %v1039
    %v1041 = vsub.f32 1.0, %v1040
    %v1042 = vmul.f32 %v1039, %v1041
    %v1043 = vadd.f32 %v1039, %v1042
    %vm1044 = vweird.f32 %v1038
    %vm1045 = vweird.f32 %v1039
    %vm1046 = vmor %vm1044, %vm1045
    %v1047 = vsel %vm1046, %v1039, %v1043
    %v1048 = vand.u32 2147483647, %v1038
    %vm1049 = vcmp.eq.f32.partialorder %v1048, 8.507059e+37
    %v1050 = vand.u32 %v1038, 2147483648
    %v1051 = vor.u32 1.1754944e-38, %v1050
    %v1052 = vsel %vm1049, %v1051, %v1047
    %v1053 = vmul.f32 1.0, %v1052
    %v1054 = vadd.f32 %v1009, %v367
    %v1055 = vmul.f32 %v1030, %v1054
    %v1056 = vrot.slane %v950, 2
    %v1058 = vadd.f32 %v1056, %v1055
    %v1059 = vtanh.pop %v1058
    %v1060 = vsub.f32 1.0, %v1053
    %v1061 = vmul.f32 %v1060, %v1059
    %v1062 = vmul.f32 %v1053, %v947
    %v1063 = vadd.f32 %v1061, %v1062
    %1064 = vst [vmem:[#allocation9 + $0x5] sm:$0x1] %v1063
    %s1065 = scalar_lea.vmem [#allocation2], 6
    %v1066 = vld [vmem:[%s1065] ss:$8 sm:$0x7]
    %1067 = vmatpush.msra.mxu0 %v364
    %1068 = vmatpush.msra.mxu0 %v361
    %1069 = vmatpush.msra.mxu0 %v358
    %1070 = vmatpush.msra.mxu0 %v355
    %1071 = vmatpush.msra.mxu0 %v352
    %1072 = vmatpush.msra.mxu0 %v349
    %1073 = vmatpush.msra.mxu0 %v346
    %1074 = vmatpush.msra.mxu0 %v343
    %1075 = vmatpush.msra.mxu0 %v340
    %1076 = vmatpush.msra.mxu0 %v337
    %1077 = vmatpush.msra.mxu0 %v334
    %1078 = vmatpush.msra.mxu0 %v331
    %1079 = vmatpush.msra.mxu0 %v328
    %1080 = vmatpush.msra.mxu0 %v325
    %1081 = vmatpush.msra.mxu0 %v322
    %1082 = vmatpush.msra.mxu0 %v319
    %1083 = vmatmul.f32.gmra.mxu0 %v1063
    %v1084 = vpop.f32.mrf.mxu0
    %v1085 = vadd.f32 0.0, %v1084
    %1086 = vdwg.mxu0
    %1087 = vmatpush.msra.mxu0 %v365
    %1088 = vmatpush.msra.mxu0 %v362
    %1089 = vmatpush.msra.mxu0 %v359
    %1090 = vmatpush.msra.mxu0 %v356
    %1091 = vmatpush.msra.mxu0 %v353
    %1092 = vmatpush.msra.mxu0 %v350
    %1093 = vmatpush.msra.mxu0 %v347
    %1094 = vmatpush.msra.mxu0 %v344
    %1095 = vmatpush.msra.mxu0 %v341
    %1096 = vmatpush.msra.mxu0 %v338
    %1097 = vmatpush.msra.mxu0 %v335
    %1098 = vmatpush.msra.mxu0 %v332
    %1099 = vmatpush.msra.mxu0 %v329
    %1100 = vmatpush.msra.mxu0 %v326
    %1101 = vmatpush.msra.mxu0 %v323
    %1102 = vmatpush.msra.mxu0 %v320
    %1103 = vmatmul.f32.gmra.mxu0 %v1063
    %v1104 = vpop.f32.mrf.mxu0
    %v1105 = vadd.f32 0.0, %v1104
    %1106 = vdwg.mxu0
    %1107 = vmatpush.msra.mxu0 %v366
    %1108 = vmatpush.msra.mxu0 %v363
    %1109 = vmatpush.msra.mxu0 %v360
    %1110 = vmatpush.msra.mxu0 %v357
    %1111 = vmatpush.msra.mxu0 %v354
    %1112 = vmatpush.msra.mxu0 %v351
    %1113 = vmatpush.msra.mxu0 %v348
    %1114 = vmatpush.msra.mxu0 %v345
    %1115 = vmatpush.msra.mxu0 %v342
    %1116 = vmatpush.msra.mxu0 %v339
    %1117 = vmatpush.msra.mxu0 %v336
    %1118 = vmatpush.msra.mxu0 %v333
    %1119 = vmatpush.msra.mxu0 %v330
    %1120 = vmatpush.msra.mxu0 %v327
    %1121 = vmatpush.msra.mxu0 %v324
    %1122 = vmatpush.msra.mxu0 %v321
    %1123 = vmatmul.f32.gmra.mxu0 %v1063
    %v1124 = vpop.f32.mrf.mxu0
    %v1125 = vadd.f32 0.0, %v1124
    %1126 = vdwg.mxu0
    %v1127 = vadd.f32 %v1066, %v1085
    %v1128 = vxor.u32 %v1127, 2147483648
    %v1129 = vmul.f32 %v1128, 1.442695
    %v1130 = vpow.pop %v1129
    %v1131 = vadd.f32 %v1130, 1.0
    %v1132 = vrcp.pop %v1131
    %v1133 = vmul.f32 %v1131, %v1132
    %v1134 = vsub.f32 1.0, %v1133
    %v1135 = vmul.f32 %v1132, %v1134
    %v1136 = vadd.f32 %v1132, %v1135
    %vm1137 = vweird.f32 %v1131
    %vm1138 = vweird.f32 %v1132
    %vm1139 = vmor %vm1137, %vm1138
    %v1140 = vsel %vm1139, %v1132, %v1136
    %v1141 = vand.u32 2147483647, %v1131
    %vm1142 = vcmp.eq.f32.partialorder %v1141, 8.507059e+37
    %v1143 = vand.u32 %v1131, 2147483648
    %v1144 = vor.u32 1.1754944e-38, %v1143
    %v1145 = vsel %vm1142, %v1144, %v1140
    %v1146 = vmul.f32 1.0, %v1145
    %v1148 = vrot.slane %v1066, 1
    %v1150 = vadd.f32 %v1148, %v1105
    %v1151 = vxor.u32 %v1150, 2147483648
    %v1152 = vmul.f32 %v1151, 1.442695
    %v1153 = vpow.pop %v1152
    %v1154 = vadd.f32 %v1153, 1.0
    %v1155 = vrcp.pop %v1154
    %v1156 = vmul.f32 %v1154, %v1155
    %v1157 = vsub.f32 1.0, %v1156
    %v1158 = vmul.f32 %v1155, %v1157
    %v1159 = vadd.f32 %v1155, %v1158
    %vm1160 = vweird.f32 %v1154
    %vm1161 = vweird.f32 %v1155
    %vm1162 = vmor %vm1160, %vm1161
    %v1163 = vsel %vm1162, %v1155, %v1159
    %v1164 = vand.u32 2147483647, %v1154
    %vm1165 = vcmp.eq.f32.partialorder %v1164, 8.507059e+37
    %v1166 = vand.u32 %v1154, 2147483648
    %v1167 = vor.u32 1.1754944e-38, %v1166
    %v1168 = vsel %vm1165, %v1167, %v1163
    %v1169 = vmul.f32 1.0, %v1168
    %v1170 = vadd.f32 %v1125, %v367
    %v1171 = vmul.f32 %v1146, %v1170
    %v1172 = vrot.slane %v1066, 2
    %v1174 = vadd.f32 %v1172, %v1171
    %v1175 = vtanh.pop %v1174
    %v1176 = vsub.f32 1.0, %v1169
    %v1177 = vmul.f32 %v1176, %v1175
    %v1178 = vmul.f32 %v1169, %v1063
    %v1179 = vadd.f32 %v1177, %v1178
    %1180 = vst [vmem:[#allocation9 + $0x6] sm:$0x1] %v1179
    %s1181 = scalar_lea.vmem [#allocation2], 7
    %v1182 = vld [vmem:[%s1181] ss:$8 sm:$0x7]
    %1183 = vmatpush.msra.mxu0 %v364
    %1184 = vmatpush.msra.mxu0 %v361
    %1185 = vmatpush.msra.mxu0 %v358
    %1186 = vmatpush.msra.mxu0 %v355
    %1187 = vmatpush.msra.mxu0 %v352
    %1188 = vmatpush.msra.mxu0 %v349
    %1189 = vmatpush.msra.mxu0 %v346
    %1190 = vmatpush.msra.mxu0 %v343
    %1191 = vmatpush.msra.mxu0 %v340
    %1192 = vmatpush.msra.mxu0 %v337
    %1193 = vmatpush.msra.mxu0 %v334
    %1194 = vmatpush.msra.mxu0 %v331
    %1195 = vmatpush.msra.mxu0 %v328
    %1196 = vmatpush.msra.mxu0 %v325
    %1197 = vmatpush.msra.mxu0 %v322
    %1198 = vmatpush.msra.mxu0 %v319
    %1199 = vmatmul.f32.gmra.mxu0 %v1179
    %v1200 = vpop.f32.mrf.mxu0
    %v1201 = vadd.f32 0.0, %v1200
    %1202 = vdwg.mxu0
    %1203 = vmatpush.msra.mxu0 %v365
    %1204 = vmatpush.msra.mxu0 %v362
    %1205 = vmatpush.msra.mxu0 %v359
    %1206 = vmatpush.msra.mxu0 %v356
    %1207 = vmatpush.msra.mxu0 %v353
    %1208 = vmatpush.msra.mxu0 %v350
    %1209 = vmatpush.msra.mxu0 %v347
    %1210 = vmatpush.msra.mxu0 %v344
    %1211 = vmatpush.msra.mxu0 %v341
    %1212 = vmatpush.msra.mxu0 %v338
    %1213 = vmatpush.msra.mxu0 %v335
    %1214 = vmatpush.msra.mxu0 %v332
    %1215 = vmatpush.msra.mxu0 %v329
    %1216 = vmatpush.msra.mxu0 %v326
    %1217 = vmatpush.msra.mxu0 %v323
    %1218 = vmatpush.msra.mxu0 %v320
    %1219 = vmatmul.f32.gmra.mxu0 %v1179
    %v1220 = vpop.f32.mrf.mxu0
    %v1221 = vadd.f32 0.0, %v1220
    %1222 = vdwg.mxu0
    %1223 = vmatpush.msra.mxu0 %v366
    %1224 = vmatpush.msra.mxu0 %v363
    %1225 = vmatpush.msra.mxu0 %v360
    %1226 = vmatpush.msra.mxu0 %v357
    %1227 = vmatpush.msra.mxu0 %v354
    %1228 = vmatpush.msra.mxu0 %v351
    %1229 = vmatpush.msra.mxu0 %v348
    %1230 = vmatpush.msra.mxu0 %v345
    %1231 = vmatpush.msra.mxu0 %v342
    %1232 = vmatpush.msra.mxu0 %v339
    %1233 = vmatpush.msra.mxu0 %v336
    %1234 = vmatpush.msra.mxu0 %v333
    %1235 = vmatpush.msra.mxu0 %v330
    %1236 = vmatpush.msra.mxu0 %v327
    %1237 = vmatpush.msra.mxu0 %v324
    %1238 = vmatpush.msra.mxu0 %v321
    %1239 = vmatmul.f32.gmra.mxu0 %v1179
    %v1240 = vpop.f32.mrf.mxu0
    %v1241 = vadd.f32 0.0, %v1240
    %1242 = vdwg.mxu0
    %v1243 = vadd.f32 %v1182, %v1201
    %v1244 = vxor.u32 %v1243, 2147483648
    %v1245 = vmul.f32 %v1244, 1.442695
    %v1246 = vpow.pop %v1245
    %v1247 = vadd.f32 %v1246, 1.0
    %v1248 = vrcp.pop %v1247
    %v1249 = vmul.f32 %v1247, %v1248
    %v1250 = vsub.f32 1.0, %v1249
    %v1251 = vmul.f32 %v1248, %v1250
    %v1252 = vadd.f32 %v1248, %v1251
    %vm1253 = vweird.f32 %v1247
    %vm1254 = vweird.f32 %v1248
    %vm1255 = vmor %vm1253, %vm1254
    %v1256 = vsel %vm1255, %v1248, %v1252
    %v1257 = vand.u32 2147483647, %v1247
    %vm1258 = vcmp.eq.f32.partialorder %v1257, 8.507059e+37
    %v1259 = vand.u32 %v1247, 2147483648
    %v1260 = vor.u32 1.1754944e-38, %v1259
    %v1261 = vsel %vm1258, %v1260, %v1256
    %v1262 = vmul.f32 1.0, %v1261
    %v1264 = vrot.slane %v1182, 1
    %v1266 = vadd.f32 %v1264, %v1221
    %v1267 = vxor.u32 %v1266, 2147483648
    %v1268 = vmul.f32 %v1267, 1.442695
    %v1269 = vpow.pop %v1268
    %v1270 = vadd.f32 %v1269, 1.0
    %v1271 = vrcp.pop %v1270
    %v1272 = vmul.f32 %v1270, %v1271
    %v1273 = vsub.f32 1.0, %v1272
    %v1274 = vmul.f32 %v1271, %v1273
    %v1275 = vadd.f32 %v1271, %v1274
    %vm1276 = vweird.f32 %v1270
    %vm1277 = vweird.f32 %v1271
    %vm1278 = vmor %vm1276, %vm1277
    %v1279 = vsel %vm1278, %v1271, %v1275
    %v1280 = vand.u32 2147483647, %v1270
    %vm1281 = vcmp.eq.f32.partialorder %v1280, 8.507059e+37
    %v1282 = vand.u32 %v1270, 2147483648
    %v1283 = vor.u32 1.1754944e-38, %v1282
    %v1284 = vsel %vm1281, %v1283, %v1279
    %v1285 = vmul.f32 1.0, %v1284
    %v1286 = vadd.f32 %v1241, %v367
    %v1287 = vmul.f32 %v1262, %v1286
    %v1288 = vrot.slane %v1182, 2
    %v1290 = vadd.f32 %v1288, %v1287
    %v1291 = vtanh.pop %v1290
    %v1292 = vsub.f32 1.0, %v1285
    %v1293 = vmul.f32 %v1292, %v1291
    %v1294 = vmul.f32 %v1285, %v1179
    %v1295 = vadd.f32 %v1293, %v1294
    %1296 = vst [vmem:[#allocation9 + $0x7] sm:$0x1] %v1295
    // Predicated region
    $region42: #{tpu_custom_call.1} parent=1 // pred_check
      _
    $region43: #{tpu_custom_call.1} parent=1 // pred_check_branch
      %1298 = sbr.rel (0) target = $region45
    $region44: #{tpu_custom_call.1} parent=1 // pred_region
      %1300 = vsyncadd [#allocation5], 0
      %s1302 = sshll.u32 [#allocation9], 4
      %s1303 = int_to_ptr.vmem [resolvable:$true] %s1302
      %s1304 = sshll.u32 %s7, 4
      %s1305 = int_to_ptr.hbm [resolvable:$true] %s1304
      %1307 = dma.vmem_to_hbm [thread:$0]  %s1303, 128, %s1305, [#allocation5]
    $region45: #{tpu_custom_call.1} parent=1 // pred_fallthru
      _
    // Predicated region
    $region46: #{tpu_custom_call.1} parent=1 // pred_check
      _
    $region47: #{tpu_custom_call.1} parent=1 // pred_check_branch
      %1309 = sbr.rel (0) target = $region49
    $region48: #{tpu_custom_call.1} parent=1 // pred_region
      %1311 = dma.done [#allocation5], 128
    $region49: #{tpu_custom_call.1} parent=1 // pred_fallthru
      _
    %1312 = vsyncpa [#allocation4], 1
    %1313 = vsyncpa [#allocation7], 1
    %1314 = vsyncpa [#allocation5], 1

</llo_original>
